<compile_context>
chip_gen: v6e
topology: v6e:2x2x1
jax: 0.10.0
libtpu: 0.0.40
codegen_flags: <defaults>
</compile_context>

<pallas_src>
import functools

import jax
import jax.numpy as jnp
from jax.experimental import pallas as pl
from jax.experimental.pallas import tpu as pltpu

EPS = 1e-5
VMEM_LIMIT = 32 * 1024 * 1024


def _cparams():
    return pltpu.CompilerParams(
        dimension_semantics=("parallel",),
        vmem_limit_bytes=VMEM_LIMIT)


def _row_block(m, target):
    """Largest multiple-of-8 divisor of m that is <= target (else m)."""
    best = None
    r = 8
    while r <= min(m, target):
        if m % r == 0:
            best = r
        r += 8
    return best if best is not None else m


def _block_diag_1x1(w, reps):
    """(Cin, Cout) 1x1-conv weight -> block-diagonal (reps*Cin, reps*Cout)."""
    cin, cout = w.shape
    eye = jnp.eye(reps, dtype=w.dtype)
    return jnp.einsum('wv,io->wivo', eye, w).reshape(reps * cin, reps * cout)


def _bn_scale_shift(stats, gamma, beta, count, wdim, c):
    """Fold per-tile (sum, sumsq) partials into packed BN scale/shift (1, wdim*c)."""
    s = stats.reshape(-1, 2, wdim, c).sum(axis=(0, 2))        # (2, c)
    mean = s[0] / count
    var = jnp.maximum(s[1] / count - mean * mean, 0.0)        # biased batch var
    scale = gamma.reshape(-1) * jax.lax.rsqrt(var + EPS)
    shift = beta.reshape(-1) - mean * scale
    return jnp.tile(scale, (wdim,))[None, :], jnp.tile(shift, (wdim,))[None, :]


# ----------------------------------------------------------------------------
# Kernels
# ----------------------------------------------------------------------------
def pw_conv_stats_kernel(x_ref, w_ref, y_ref, st_ref):
    """1x1 conv (block-diag packed matmul) + per-tile sum/sumsq partials."""
    y = jnp.dot(x_ref[...], w_ref[...], preferred_element_type=jnp.float32)
    y_ref[...] = y
    st_ref[0:1, :] = jnp.sum(y, axis=0, keepdims=True)
    st_ref[1:2, :] = jnp.sum(y * y, axis=0, keepdims=True)


def bn_act_pw_conv_stats_kernel(x_ref, s_ref, b_ref, w_ref, y_ref, st_ref):
    """BN (precomputed scale/shift) + ReLU6 + 1x1 conv + per-tile stats."""
    z = jnp.clip(x_ref[...] * s_ref[...] + b_ref[...], 0.0, 6.0)
    y = jnp.dot(z, w_ref[...], preferred_element_type=jnp.float32)
    y_ref[...] = y
    st_ref[0:1, :] = jnp.sum(y, axis=0, keepdims=True)
    st_ref[1:2, :] = jnp.sum(y * y, axis=0, keepdims=True)


def bn_apply_kernel(x_ref, s_ref, b_ref, o_ref):
    """Final BN affine (lane-dense elementwise)."""
    o_ref[...] = x_ref[...] * s_ref[...] + b_ref[...]


def dw_conv_kernel(y1_ref, s1_ref, b1_ref, w2_ref, o_ref, st_ref, ypad_ref,
                   *, H, W, C, stride):
    """BN1 + ReLU6 + 3x3 depthwise conv (pad=1) on one image, packed (H, W*C).

    H taps come from a row-padded VMEM scratch (zero halo rows); W taps use
    pltpu.roll along the packed lane axis + iota edge masks (no concatenates).
    """
    L = W * C
    zrow = jnp.zeros((1, L), jnp.float32)
    # Zero halo rows every step (scratch is per-core; never rely on step 0).
    ypad_ref[0:1, :] = zrow
    ypad_ref[H + 1:H + 2, :] = zrow
    # BN1 + ReLU6, written into the scratch interior (zero-padded conv input).
    ypad_ref[1:H + 1, :] = jnp.clip(
        y1_ref[...] * s1_ref[...] + b1_ref[...], 0.0, 6.0)

    lane = jax.lax.broadcasted_iota(jnp.int32, (H, L), 1)
    acc = jnp.zeros((H, L), jnp.float32)
    for kh in range(3):
        ysh = ypad_ref[kh:kh + H, :]                 # rows h + (kh - 1)
        for kw in range(3):
            dw = kw - 1
            tap = w2_ref[kh * 3 + kw:kh * 3 + kw + 1, :]   # (1, L), lane-aligned
            if dw == 0:
                term = ysh
            else:
                shifted = pltpu.roll(ysh, shift=(-dw * C) % L, axis=1)
                valid = (lane + dw * C >= 0) & (lane + dw * C < L)
                term = jnp.where(valid, shifted, 0.0)
            acc = acc + term * tap

    if stride == 2:
        # TODO(synk): compute stride-2 taps directly at output resolution
        # instead of full-res accumulate + reshape subsample.
        Ho, Wo = H // 2, W // 2
        acc = acc.reshape(H, Wo, 2 * C)[:, :, :C].reshape(H, Wo * C)
        acc = acc.reshape(Ho, 2, Wo * C)[:, 0, :]

    o_ref[...] = acc
    st_ref[0:1, :] = jnp.sum(acc, axis=0, keepdims=True)
    st_ref[1:2, :] = jnp.sum(acc * acc, axis=0, keepdims=True)


# ----------------------------------------------------------------------------
# Wrapper
# ----------------------------------------------------------------------------
def mobilenet_block(x_nhwc, params, stride, *, row_block=256):
    assert stride in (1, 2)
    N, H, W, Cin = x_nhwc.shape
    Cmid = params["w1"].shape[1]
    Cout = params["w3"].shape[1]
    if stride == 2:
        assert H % 2 == 0 and W % 2 == 0
    Ho, Wo = H // stride, W // stride
    L_in, L_mid = W * Cin, W * Cmid
    L_mid_o, L_out = Wo * Cmid, Wo * Cout
    f32 = jnp.float32

    # TODO(synk): on v6e/v7x store inter-stage activations in bf16 to halve
    # HBM/VMEM traffic (kept f32 here: v5e has no bf16 VPU and tolerances are tight).
    x2d = x_nhwc.astype(f32).reshape(N * H, L_in)
    w1bd = _block_diag_1x1(params["w1"].astype(f32), W)    # (W*Cin,  W*Cmid)
    w3bd = _block_diag_1x1(params["w3"].astype(f32), Wo)   # (Wo*Cmid, Wo*Cout)
    w2p = jnp.tile(params["w2"].astype(f32), (1, W))       # (9, W*Cmid)

    # ---- stage 1: 1x1 conv + BN1 partial stats ------------------------------
    M1 = N * H
    rb1 = _row_block(M1, row_block)
    y1, st1 = pl.pallas_call(
        pw_conv_stats_kernel,
        grid=(M1 // rb1,),
        in_specs=[pl.BlockSpec((rb1, L_in), lambda i: (i, 0)),
                  pl.BlockSpec((L_in, L_mid), lambda i: (0, 0))],
        out_specs=[pl.BlockSpec((rb1, L_mid), lambda i: (i, 0)),
                   pl.BlockSpec((None, 2, L_mid), lambda i: (i, 0, 0))],
        out_shape=[jax.ShapeDtypeStruct((M1, L_mid), f32),
                   jax.ShapeDtypeStruct((M1 // rb1, 2, L_mid), f32)],
        compiler_params=_cparams(),
    )(x2d, w1bd)
    s1, b1 = _bn_scale_shift(st1, params["g1"], params["b1"], N * H * W, W, Cmid)

    # ---- stage 2: BN1 + ReLU6 + 3x3 depthwise + BN2 partial stats -----------
    y2, st2 = pl.pallas_call(
        functools.partial(dw_conv_kernel, H=H, W=W, C=Cmid, stride=stride),
        grid=(N,),
        in_specs=[pl.BlockSpec((None, H, L_mid), lambda n: (n, 0, 0)),
                  pl.BlockSpec((1, L_mid), lambda n: (0, 0)),
                  pl.BlockSpec((1, L_mid), lambda n: (0, 0)),
                  pl.BlockSpec((9, L_mid), lambda n: (0, 0))],
        out_specs=[pl.BlockSpec((None, Ho, L_mid_o), lambda n: (n, 0, 0)),
                   pl.BlockSpec((None, 2, L_mid_o), lambda n: (n, 0, 0))],
        out_shape=[jax.ShapeDtypeStruct((N, Ho, L_mid_o), f32),
                   jax.ShapeDtypeStruct((N, 2, L_mid_o), f32)],
        scratch_shapes=[pltpu.VMEM((H + 2, L_mid), f32)],
        compiler_params=_cparams(),
    )(y1.reshape(N, H, L_mid), s1, b1, w2p)
    s2, b2 = _bn_scale_shift(st2, params["g2"], params["b2"],
                             N * Ho * Wo, Wo, Cmid)

    # ---- stage 3: BN2 + ReLU6 + 1x1 conv + BN3 partial stats ----------------
    M3 = N * Ho
    rb3 = _row_block(M3, row_block)
    y2f = y2.reshape(M3, L_mid_o)
    y3, st3 = pl.pallas_call(
        bn_act_pw_conv_stats_kernel,
        grid=(M3 // rb3,),
        in_specs=[pl.BlockSpec((rb3, L_mid_o), lambda i: (i, 0)),
                  pl.BlockSpec((1, L_mid_o), lambda i: (0, 0)),
                  pl.BlockSpec((1, L_mid_o), lambda i: (0, 0)),
                  pl.BlockSpec((L_mid_o, L_out), lambda i: (0, 0))],
        out_specs=[pl.BlockSpec((rb3, L_out), lambda i: (i, 0)),
                   pl.BlockSpec((None, 2, L_out), lambda i: (i, 0, 0))],
        out_shape=[jax.ShapeDtypeStruct((M3, L_out), f32),
                   jax.ShapeDtypeStruct((M3 // rb3, 2, L_out), f32)],
        compiler_params=_cparams(),
    )(y2f, s2, b2, w3bd)
    s3, b3 = _bn_scale_shift(st3, params["g3"], params["b3"],
                             N * Ho * Wo, Wo, Cout)

    # ---- stage 4: BN3 affine -------------------------------------------------
    rb4 = _row_block(M3, row_block)
    out2d = pl.pallas_call(
        bn_apply_kernel,
        grid=(M3 // rb4,),
        in_specs=[pl.BlockSpec((rb4, L_out), lambda i: (i, 0)),
                  pl.BlockSpec((1, L_out), lambda i: (0, 0)),
                  pl.BlockSpec((1, L_out), lambda i: (0, 0))],
        out_specs=pl.BlockSpec((rb4, L_out), lambda i: (i, 0)),
        out_shape=jax.ShapeDtypeStruct((M3, L_out), f32),
        compiler_params=_cparams(),
    )(y3, s3, b3)

    return out2d.reshape(N, Ho, Wo, Cout)


# ----------------------------------------------------------------------------
# Params / pure-JAX reference (matches PyTorch Block.forward in training mode)
# ----------------------------------------------------------------------------
def init_params(key, in_planes, out_planes, expansion):
    planes = expansion * in_planes
    ks = jax.random.split(key, 9)
    return {
        "w1": jax.random.normal(ks[0], (in_planes, planes), jnp.float32)
              * (1.0 / jnp.sqrt(in_planes)),
        "w2": jax.random.normal(ks[1], (9, planes), jnp.float32) / 3.0,
        "w3": jax.random.normal(ks[2], (planes, out_planes), jnp.float32)
              * (1.0 / jnp.sqrt(planes)),
        "g1": 1.0 + 0.1 * jax.random.normal(ks[3], (1, planes), jnp.float32),
        "b1": 0.1 * jax.random.normal(ks[4], (1, planes), jnp.float32),
        "g2": 1.0 + 0.1 * jax.random.normal(ks[5], (1, planes), jnp.float32),
        "b2": 0.1 * jax.random.normal(ks[6], (1, planes), jnp.float32),
        "g3": 1.0 + 0.1 * jax.random.normal(ks[7], (1, out_planes), jnp.float32),
        "b3": 0.1 * jax.random.normal(ks[8], (1, out_planes), jnp.float32),
    }


def reference_block(x, p, stride):
    def bn(y, g, b):
        mean = y.mean(axis=(0, 1, 2), keepdims=True)
        var = ((y - mean) ** 2).mean(axis=(0, 1, 2), keepdims=True)
        return ((y - mean) / jnp.sqrt(var + EPS)
                * g.reshape(1, 1, 1, -1) + b.reshape(1, 1, 1, -1))

    y = jnp.einsum('nhwc,ck->nhwk', x, p["w1"])
    y = jnp.clip(bn(y, p["g1"], p["b1"]), 0.0, 6.0)
    rhs = p["w2"].reshape(3, 3, 1, -1)                 # HWIO, depthwise
    y = jax.lax.conv_general_dilated(
        y, rhs, (stride, stride), ((1, 1), (1, 1)),
        dimension_numbers=('NHWC', 'HWIO', 'NHWC'),
        feature_group_count=rhs.shape[-1])
    y = jnp.clip(bn(y, p["g2"], p["b2"]), 0.0, 6.0)
    y = jnp.einsum('nhwk,ko->nhwo', y, p["w3"])
    return bn(y, p["g3"], p["b3"])


if __name__ == "__main__":
    key = jax.random.PRNGKey(0)
    N, Cin, Hs, Ws = 2, 4, 16, 16
    expansion, out_planes, stride = 2, 8, 1

    kx, kp = jax.random.split(key)
    x_nchw = jax.random.normal(kx, (N, Cin, Hs, Ws), jnp.float32)  # PyTorch NCHW
    x_nhwc = jnp.transpose(x_nchw, (0, 2, 3, 1))                   # kernel layout
    params = init_params(kp, Cin, out_planes, expansion)

    # row_block=16 exercises a multi-step pipelined grid at this toy size;
    # use the default (256) for production shapes.
    block_fn = jax.jit(functools.partial(mobilenet_block, stride=stride,
                                         row_block=16))
    out = jax.block_until_ready(block_fn(x_nhwc, params))

    ref = reference_block(x_nhwc, params, stride)
    assert out.shape == ref.shape, (out.shape, ref.shape)
    max_err = float(jnp.max(jnp.abs(out - ref)))
    assert jnp.allclose(out, ref, rtol=1e-3, atol=1e-3), max_err

    print("KERNEL_OK")
</pallas_src>

<mosaic_0001>
module attributes {stable_mosaic.version = 11 : i64} {
  func.func @pw_conv_stats_kernel(%arg0: i32, %arg1: memref<16x64xf32, #tpu.memory_space<vmem>>, %arg2: memref<64x128xf32, #tpu.memory_space<vmem>>, %arg3: memref<16x128xf32, #tpu.memory_space<vmem>>, %arg4: memref<1x2x128xf32, #tpu.memory_space<vmem>>) attributes {dimension_semantics = [#tpu.dimension_semantics<parallel>], iteration_bounds = array<i64: 2>, scalar_prefetch = 0 : i64, scratch_operands = 0 : i64, tpu.core_type = #tpu.core_type<tc>, window_params = [{transform_indices = @transform_0, window_bounds = array<i64: 16, 64>}, {pipeline_mode = #tpu.pipeline_mode<synchronous>, transform_indices = @transform_1, window_bounds = array<i64: 64, 128>}, {transform_indices = @transform_2, window_bounds = array<i64: 16, 128>}, {transform_indices = @transform_3, window_bounds = array<i64: 1, 2, 128>}]} {
    %c0 = arith.constant 0 : index
    %c0_0 = arith.constant 0 : index
    %0 = vector.load %arg1[%c0, %c0_0] : memref<16x64xf32, #tpu.memory_space<vmem>>, vector<16x64xf32>
    %c0_1 = arith.constant 0 : index
    %c0_2 = arith.constant 0 : index
    %1 = vector.load %arg2[%c0_1, %c0_2] : memref<64x128xf32, #tpu.memory_space<vmem>>, vector<64x128xf32>
    %cst = arith.constant dense<0.000000e+00> : vector<16x128xf32>
    %2 = tpu.matmul %0, %1, %cst {dimension_numbers = #tpu.dot_dimension_numbers<[1], [0], [0], [1], [0, 0, 1, 1], [], []>} : vector<16x64xf32>, vector<64x128xf32>, vector<16x128xf32> -> vector<16x128xf32>
    %c0_3 = arith.constant 0 : index
    %c0_4 = arith.constant 0 : index
    %3 = vector.load %arg3[%c0_3, %c0_4] : memref<16x128xf32, #tpu.memory_space<vmem>>, vector<16x128xf32>
    tpu.vector_store %arg3[%c0_3, %c0_4], %2 {strides = array<i32>} : memref<16x128xf32, #tpu.memory_space<vmem>>, vector<16x128xf32>,
    %cst_5 = arith.constant dense<0.000000e+00> : vector<128xf32>
    %4 = vector.multi_reduction <add>, %2, %cst_5 [0] : vector<16x128xf32> to vector<128xf32>
    %5 = vector.shape_cast %4 : vector<128xf32> to vector<1x128xf32>
    %c0_6 = arith.constant 0 : index
    %c0_7 = arith.constant 0 : index
    %c0_8 = arith.constant 0 : index
    %6 = vector.load %arg4[%c0_6, %c0_7, %c0_8] : memref<1x2x128xf32, #tpu.memory_space<vmem>>, vector<1x1x128xf32>
    %7 = vector.shape_cast %6 : vector<1x1x128xf32> to vector<1x128xf32>
    %8 = vector.shape_cast %5 : vector<1x128xf32> to vector<1x1x128xf32>
    tpu.vector_store %arg4[%c0_6, %c0_7, %c0_8], %8 {strides = array<i32>} : memref<1x2x128xf32, #tpu.memory_space<vmem>>, vector<1x1x128xf32>,
    %9 = arith.mulf %2, %2 : vector<16x128xf32>
    %cst_9 = arith.constant dense<0.000000e+00> : vector<128xf32>
    %10 = vector.multi_reduction <add>, %9, %cst_9 [0] : vector<16x128xf32> to vector<128xf32>
    %11 = vector.shape_cast %10 : vector<128xf32> to vector<1x128xf32>
    %c0_10 = arith.constant 0 : index
    %c1 = arith.constant 1 : index
    %c0_11 = arith.constant 0 : index
    %12 = vector.load %arg4[%c0_10, %c1, %c0_11] : memref<1x2x128xf32, #tpu.memory_space<vmem>>, vector<1x1x128xf32>
    %13 = vector.shape_cast %12 : vector<1x1x128xf32> to vector<1x128xf32>
    %14 = vector.shape_cast %11 : vector<1x128xf32> to vector<1x1x128xf32>
    tpu.vector_store %arg4[%c0_10, %c1, %c0_11], %14 {strides = array<i32>} : memref<1x2x128xf32, #tpu.memory_space<vmem>>, vector<1x1x128xf32>,
    return
  }
  func.func @transform_0(%arg0: i32) -> (i32, i32) {
    %c0_i32 = arith.constant 0 : i32
    %c0_i32_0 = arith.constant 0 : i32
    return %arg0, %c0_i32 : i32, i32
  }
  func.func @transform_1(%arg0: i32) -> (i32, i32) {
    %c0_i32 = arith.constant 0 : i32
    %c0_i32_0 = arith.constant 0 : i32
    %c0_i32_1 = arith.constant 0 : i32
    return %c0_i32, %c0_i32_0 : i32, i32
  }
  func.func @transform_2(%arg0: i32) -> (i32, i32) {
    %c0_i32 = arith.constant 0 : i32
    %c0_i32_0 = arith.constant 0 : i32
    return %arg0, %c0_i32 : i32, i32
  }
  func.func @transform_3(%arg0: i32) -> (i32, i32, i32) {
    %c0_i32 = arith.constant 0 : i32
    %c0_i32_0 = arith.constant 0 : i32
    %c0_i32_1 = arith.constant 0 : i32
    return %arg0, %c0_i32, %c0_i32_0 : i32, i32, i32
  }
}

module attributes {stable_mosaic.version = 11 : i64} {
  func.func @dw_conv_kernel(%arg0: i32, %arg1: memref<1x16x128xf32, #tpu.memory_space<vmem>>, %arg2: memref<1x128xf32, #tpu.memory_space<vmem>>, %arg3: memref<1x128xf32, #tpu.memory_space<vmem>>, %arg4: memref<9x128xf32, #tpu.memory_space<vmem>>, %arg5: memref<1x16x128xf32, #tpu.memory_space<vmem>>, %arg6: memref<1x2x128xf32, #tpu.memory_space<vmem>>, %arg7: memref<18x128xf32, #tpu.memory_space<vmem>>) attributes {dimension_semantics = [#tpu.dimension_semantics<parallel>], iteration_bounds = array<i64: 2>, scalar_prefetch = 0 : i64, scratch_operands = 1 : i64, tpu.core_type = #tpu.core_type<tc>, window_params = [{transform_indices = @transform_0, window_bounds = array<i64: 1, 16, 128>}, {pipeline_mode = #tpu.pipeline_mode<synchronous>, transform_indices = @transform_1, window_bounds = array<i64: 1, 128>}, {pipeline_mode = #tpu.pipeline_mode<synchronous>, transform_indices = @transform_2, window_bounds = array<i64: 1, 128>}, {pipeline_mode = #tpu.pipeline_mode<synchronous>, transform_indices = @transform_3, window_bounds = array<i64: 9, 128>}, {transform_indices = @transform_4, window_bounds = array<i64: 1, 16, 128>}, {transform_indices = @transform_5, window_bounds = array<i64: 1, 2, 128>}]} {
    %cst = arith.constant 0.000000e+00 : f32
    %0 = vector.broadcast %cst : f32 to vector<1x128xf32>
    %c0 = arith.constant 0 : index
    %c0_0 = arith.constant 0 : index
    %1 = vector.load %arg7[%c0, %c0_0] : memref<18x128xf32, #tpu.memory_space<vmem>>, vector<1x128xf32>
    tpu.vector_store %arg7[%c0, %c0_0], %0 {strides = array<i32>} : memref<18x128xf32, #tpu.memory_space<vmem>>, vector<1x128xf32>,
    %c17 = arith.constant 17 : index
    %c0_1 = arith.constant 0 : index
    %2 = vector.load %arg7[%c17, %c0_1] : memref<18x128xf32, #tpu.memory_space<vmem>>, vector<1x128xf32>
    tpu.vector_store %arg7[%c17, %c0_1], %0 {strides = array<i32>} : memref<18x128xf32, #tpu.memory_space<vmem>>, vector<1x128xf32>,
    %c0_2 = arith.constant 0 : index
    %c0_3 = arith.constant 0 : index
    %c0_4 = arith.constant 0 : index
    %3 = vector.load %arg1[%c0_2, %c0_3, %c0_4] : memref<1x16x128xf32, #tpu.memory_space<vmem>>, vector<1x16x128xf32>
    %4 = vector.shape_cast %3 : vector<1x16x128xf32> to vector<16x128xf32>
    %c0_5 = arith.constant 0 : index
    %c0_6 = arith.constant 0 : index
    %5 = vector.load %arg2[%c0_5, %c0_6] : memref<1x128xf32, #tpu.memory_space<vmem>>, vector<1x128xf32>
    %6 = vector.broadcast %5 : vector<1x128xf32> to vector<16x128xf32>
    %7 = arith.mulf %4, %6 : vector<16x128xf32>
    %c0_7 = arith.constant 0 : index
    %c0_8 = arith.constant 0 : index
    %8 = vector.load %arg3[%c0_7, %c0_8] : memref<1x128xf32, #tpu.memory_space<vmem>>, vector<1x128xf32>
    %9 = vector.broadcast %8 : vector<1x128xf32> to vector<16x128xf32>
    %10 = arith.addf %7, %9 : vector<16x128xf32>
    %cst_9 = arith.constant 0.000000e+00 : f32
    %cst_10 = arith.constant 6.000000e+00 : f32
    %11 = vector.broadcast %cst_9 : f32 to vector<16x128xf32>
    %12 = arith.maximumf %11, %10 : vector<16x128xf32>
    %13 = vector.broadcast %cst_10 : f32 to vector<16x128xf32>
    %14 = arith.minimumf %13, %12 : vector<16x128xf32>
    %c1 = arith.constant 1 : index
    %c0_11 = arith.constant 0 : index
    %15 = vector.load %arg7[%c1, %c0_11] : memref<18x128xf32, #tpu.memory_space<vmem>>, vector<16x128xf32>
    tpu.vector_store %arg7[%c1, %c0_11], %14 {strides = array<i32>} : memref<18x128xf32, #tpu.memory_space<vmem>>, vector<16x128xf32>,
    %16 = tpu.iota {dimensions = array<i32: 1>} : vector<16x128xi32>
    %cst_12 = arith.constant 0.000000e+00 : f32
    %17 = vector.broadcast %cst_12 : f32 to vector<16x128xf32>
    %c0_13 = arith.constant 0 : index
    %c0_14 = arith.constant 0 : index
    %18 = vector.load %arg7[%c0_13, %c0_14] : memref<18x128xf32, #tpu.memory_space<vmem>>, vector<16x128xf32>
    %c0_15 = arith.constant 0 : index
    %c0_16 = arith.constant 0 : index
    %19 = vector.load %arg4[%c0_15, %c0_16] : memref<9x128xf32, #tpu.memory_space<vmem>>, vector<1x128xf32>
    %c8_i32 = arith.constant 8 : i32
    %20 = tpu.dynamic_rotate %18 by %c8_i32 dim 1 : vector<16x128xf32>, i32 -> vector<16x128xf32>
    %c-8_i32 = arith.constant -8 : i32
    %21 = vector.broadcast %c-8_i32 : i32 to vector<16x128xi32>
    %22 = arith.addi %16, %21 : vector<16x128xi32>
    %c0_i32 = arith.constant 0 : i32
    %23 = vector.broadcast %c0_i32 : i32 to vector<16x128xi32>
    %24 = arith.cmpi sge, %22, %23 : vector<16x128xi32>
    %c-8_i32_17 = arith.constant -8 : i32
    %25 = vector.broadcast %c-8_i32_17 : i32 to vector<16x128xi32>
    %26 = arith.addi %16, %25 : vector<16x128xi32>
    %c128_i32 = arith.constant 128 : i32
    %27 = vector.broadcast %c128_i32 : i32 to vector<16x128xi32>
    %28 = arith.cmpi slt, %26, %27 : vector<16x128xi32>
    %29 = arith.andi %24, %28 : vector<16x128xi1>
    %cst_18 = arith.constant 0.000000e+00 : f32
    %30 = vector.broadcast %cst_18 : f32 to vector<16x128xf32>
    %31 = arith.select %29, %20, %30 : vector<16x128xi1>, vector<16x128xf32>
    %32 = vector.broadcast %19 : vector<1x128xf32> to vector<16x128xf32>
    %33 = arith.mulf %31, %32 : vector<16x128xf32>
    %34 = arith.addf %17, %33 : vector<16x128xf32>
    %c1_19 = arith.constant 1 : index
    %c0_20 = arith.constant 0 : index
    %35 = vector.load %arg4[%c1_19, %c0_20] : memref<9x128xf32, #tpu.memory_space<vmem>>, vector<1x128xf32>
    %36 = vector.broadcast %35 : vector<1x128xf32> to vector<16x128xf32>
    %37 = arith.mulf %18, %36 : vector<16x128xf32>
    %38 = arith.addf %34, %37 : vector<16x128xf32>
    %c2 = arith.constant 2 : index
    %c0_21 = arith.constant 0 : index
    %39 = vector.load %arg4[%c2, %c0_21] : memref<9x128xf32, #tpu.memory_space<vmem>>, vector<1x128xf32>
    %c120_i32 = arith.constant 120 : i32
    %40 = tpu.dynamic_rotate %18 by %c120_i32 dim 1 : vector<16x128xf32>, i32 -> vector<16x128xf32>
    %c8_i32_22 = arith.constant 8 : i32
    %41 = vector.broadcast %c8_i32_22 : i32 to vector<16x128xi32>
    %42 = arith.addi %16, %41 : vector<16x128xi32>
    %c0_i32_23 = arith.constant 0 : i32
    %43 = vector.broadcast %c0_i32_23 : i32 to vector<16x128xi32>
    %44 = arith.cmpi sge, %42, %43 : vector<16x128xi32>
    %c8_i32_24 = arith.constant 8 : i32
    %45 = vector.broadcast %c8_i32_24 : i32 to vector<16x128xi32>
    %46 = arith.addi %16, %45 : vector<16x128xi32>
    %c128_i32_25 = arith.constant 128 : i32
    %47 = vector.broadcast %c128_i32_25 : i32 to vector<16x128xi32>
    %48 = arith.cmpi slt, %46, %47 : vector<16x128xi32>
    %49 = arith.andi %44, %48 : vector<16x128xi1>
    %cst_26 = arith.constant 0.000000e+00 : f32
    %50 = vector.broadcast %cst_26 : f32 to vector<16x128xf32>
    %51 = arith.select %49, %40, %50 : vector<16x128xi1>, vector<16x128xf32>
    %52 = vector.broadcast %39 : vector<1x128xf32> to vector<16x128xf32>
    %53 = arith.mulf %51, %52 : vector<16x128xf32>
    %54 = arith.addf %38, %53 : vector<16x128xf32>
    %c1_27 = arith.constant 1 : index
    %c0_28 = arith.constant 0 : index
    %55 = vector.load %arg7[%c1_27, %c0_28] : memref<18x128xf32, #tpu.memory_space<vmem>>, vector<16x128xf32>
    %c3 = arith.constant 3 : index
    %c0_29 = arith.constant 0 : index
    %56 = vector.load %arg4[%c3, %c0_29] : memref<9x128xf32, #tpu.memory_space<vmem>>, vector<1x128xf32>
    %c8_i32_30 = arith.constant 8 : i32
    %57 = tpu.dynamic_rotate %55 by %c8_i32_30 dim 1 : vector<16x128xf32>, i32 -> vector<16x128xf32>
    %c-8_i32_31 = arith.constant -8 : i32
    %58 = vector.broadcast %c-8_i32_31 : i32 to vector<16x128xi32>
    %59 = arith.addi %16, %58 : vector<16x128xi32>
    %c0_i32_32 = arith.constant 0 : i32
    %60 = vector.broadcast %c0_i32_32 : i32 to vector<16x128xi32>
    %61 = arith.cmpi sge, %59, %60 : vector<16x128xi32>
    %c-8_i32_33 = arith.constant -8 : i32
    %62 = vector.broadcast %c-8_i32_33 : i32 to vector<16x128xi32>
    %63 = arith.addi %16, %62 : vector<16x128xi32>
    %c128_i32_34 = arith.constant 128 : i32
    %64 = vector.broadcast %c128_i32_34 : i32 to vector<16x128xi32>
    %65 = arith.cmpi slt, %63, %64 : vector<16x128xi32>
    %66 = arith.andi %61, %65 : vector<16x128xi1>
    %cst_35 = arith.constant 0.000000e+00 : f32
    %67 = vector.broadcast %cst_35 : f32 to vector<16x128xf32>
    %68 = arith.select %66, %57, %67 : vector<16x128xi1>, vector<16x128xf32>
    %69 = vector.broadcast %56 : vector<1x128xf32> to vector<16x128xf32>
    %70 = arith.mulf %68, %69 : vector<16x128xf32>
    %71 = arith.addf %54, %70 : vector<16x128xf32>
    %c4 = arith.constant 4 : index
    %c0_36 = arith.constant 0 : index
    %72 = vector.load %arg4[%c4, %c0_36] : memref<9x128xf32, #tpu.memory_space<vmem>>, vector<1x128xf32>
    %73 = vector.broadcast %72 : vector<1x128xf32> to vector<16x128xf32>
    %74 = arith.mulf %55, %73 : vector<16x128xf32>
    %75 = arith.addf %71, %74 : vector<16x128xf32>
    %c5 = arith.constant 5 : index
    %c0_37 = arith.constant 0 : index
    %76 = vector.load %arg4[%c5, %c0_37] : memref<9x128xf32, #tpu.memory_space<vmem>>, vector<1x128xf32>
    %c120_i32_38 = arith.constant 120 : i32
    %77 = tpu.dynamic_rotate %55 by %c120_i32_38 dim 1 : vector<16x128xf32>, i32 -> vector<16x128xf32>
    %c8_i32_39 = arith.constant 8 : i32
    %78 = vector.broadcast %c8_i32_39 : i32 to vector<16x128xi32>
    %79 = arith.addi %16, %78 : vector<16x128xi32>
    %c0_i32_40 = arith.constant 0 : i32
    %80 = vector.broadcast %c0_i32_40 : i32 to vector<16x128xi32>
    %81 = arith.cmpi sge, %79, %80 : vector<16x128xi32>
    %c8_i32_41 = arith.constant 8 : i32
    %82 = vector.broadcast %c8_i32_41 : i32 to vector<16x128xi32>
    %83 = arith.addi %16, %82 : vector<16x128xi32>
    %c128_i32_42 = arith.constant 128 : i32
    %84 = vector.broadcast %c128_i32_42 : i32 to vector<16x128xi32>
    %85 = arith.cmpi slt, %83, %84 : vector<16x128xi32>
    %86 = arith.andi %81, %85 : vector<16x128xi1>
    %cst_43 = arith.constant 0.000000e+00 : f32
    %87 = vector.broadcast %cst_43 : f32 to vector<16x128xf32>
    %88 = arith.select %86, %77, %87 : vector<16x128xi1>, vector<16x128xf32>
    %89 = vector.broadcast %76 : vector<1x128xf32> to vector<16x128xf32>
    %90 = arith.mulf %88, %89 : vector<16x128xf32>
    %91 = arith.addf %75, %90 : vector<16x128xf32>
    %c2_44 = arith.constant 2 : index
    %c0_45 = arith.constant 0 : index
    %92 = vector.load %arg7[%c2_44, %c0_45] : memref<18x128xf32, #tpu.memory_space<vmem>>, vector<16x128xf32>
    %c6 = arith.constant 6 : index
    %c0_46 = arith.constant 0 : index
    %93 = vector.load %arg4[%c6, %c0_46] : memref<9x128xf32, #tpu.memory_space<vmem>>, vector<1x128xf32>
    %c8_i32_47 = arith.constant 8 : i32
    %94 = tpu.dynamic_rotate %92 by %c8_i32_47 dim 1 : vector<16x128xf32>, i32 -> vector<16x128xf32>
    %c-8_i32_48 = arith.constant -8 : i32
    %95 = vector.broadcast %c-8_i32_48 : i32 to vector<16x128xi32>
    %96 = arith.addi %16, %95 : vector<16x128xi32>
    %c0_i32_49 = arith.constant 0 : i32
    %97 = vector.broadcast %c0_i32_49 : i32 to vector<16x128xi32>
    %98 = arith.cmpi sge, %96, %97 : vector<16x128xi32>
    %c-8_i32_50 = arith.constant -8 : i32
    %99 = vector.broadcast %c-8_i32_50 : i32 to vector<16x128xi32>
    %100 = arith.addi %16, %99 : vector<16x128xi32>
    %c128_i32_51 = arith.constant 128 : i32
    %101 = vector.broadcast %c128_i32_51 : i32 to vector<16x128xi32>
    %102 = arith.cmpi slt, %100, %101 : vector<16x128xi32>
    %103 = arith.andi %98, %102 : vector<16x128xi1>
    %cst_52 = arith.constant 0.000000e+00 : f32
    %104 = vector.broadcast %cst_52 : f32 to vector<16x128xf32>
    %105 = arith.select %103, %94, %104 : vector<16x128xi1>, vector<16x128xf32>
    %106 = vector.broadcast %93 : vector<1x128xf32> to vector<16x128xf32>
    %107 = arith.mulf %105, %106 : vector<16x128xf32>
    %108 = arith.addf %91, %107 : vector<16x128xf32>
    %c7 = arith.constant 7 : index
    %c0_53 = arith.constant 0 : index
    %109 = vector.load %arg4[%c7, %c0_53] : memref<9x128xf32, #tpu.memory_space<vmem>>, vector<1x128xf32>
    %110 = vector.broadcast %109 : vector<1x128xf32> to vector<16x128xf32>
    %111 = arith.mulf %92, %110 : vector<16x128xf32>
    %112 = arith.addf %108, %111 : vector<16x128xf32>
    %c8 = arith.constant 8 : index
    %c0_54 = arith.constant 0 : index
    %113 = vector.load %arg4[%c8, %c0_54] : memref<9x128xf32, #tpu.memory_space<vmem>>, vector<1x128xf32>
    %c120_i32_55 = arith.constant 120 : i32
    %114 = tpu.dynamic_rotate %92 by %c120_i32_55 dim 1 : vector<16x128xf32>, i32 -> vector<16x128xf32>
    %c8_i32_56 = arith.constant 8 : i32
    %115 = vector.broadcast %c8_i32_56 : i32 to vector<16x128xi32>
    %116 = arith.addi %16, %115 : vector<16x128xi32>
    %c0_i32_57 = arith.constant 0 : i32
    %117 = vector.broadcast %c0_i32_57 : i32 to vector<16x128xi32>
    %118 = arith.cmpi sge, %116, %117 : vector<16x128xi32>
    %c8_i32_58 = arith.constant 8 : i32
    %119 = vector.broadcast %c8_i32_58 : i32 to vector<16x128xi32>
    %120 = arith.addi %16, %119 : vector<16x128xi32>
    %c128_i32_59 = arith.constant 128 : i32
    %121 = vector.broadcast %c128_i32_59 : i32 to vector<16x128xi32>
    %122 = arith.cmpi slt, %120, %121 : vector<16x128xi32>
    %123 = arith.andi %118, %122 : vector<16x128xi1>
    %cst_60 = arith.constant 0.000000e+00 : f32
    %124 = vector.broadcast %cst_60 : f32 to vector<16x128xf32>
    %125 = arith.select %123, %114, %124 : vector<16x128xi1>, vector<16x128xf32>
    %126 = vector.broadcast %113 : vector<1x128xf32> to vector<16x128xf32>
    %127 = arith.mulf %125, %126 : vector<16x128xf32>
    %128 = arith.addf %112, %127 : vector<16x128xf32>
    %c0_61 = arith.constant 0 : index
    %c0_62 = arith.constant 0 : index
    %c0_63 = arith.constant 0 : index
    %129 = vector.load %arg5[%c0_61, %c0_62, %c0_63] : memref<1x16x128xf32, #tpu.memory_space<vmem>>, vector<1x16x128xf32>
    %130 = vector.shape_cast %129 : vector<1x16x128xf32> to vector<16x128xf32>
    %131 = vector.shape_cast %128 : vector<16x128xf32> to vector<1x16x128xf32>
    tpu.vector_store %arg5[%c0_61, %c0_62, %c0_63], %131 {strides = array<i32>} : memref<1x16x128xf32, #tpu.memory_space<vmem>>, vector<1x16x128xf32>,
    %cst_64 = arith.constant dense<0.000000e+00> : vector<128xf32>
    %132 = vector.multi_reduction <add>, %128, %cst_64 [0] : vector<16x128xf32> to vector<128xf32>
    %133 = vector.shape_cast %132 : vector<128xf32> to vector<1x128xf32>
    %c0_65 = arith.constant 0 : index
    %c0_66 = arith.constant 0 : index
    %c0_67 = arith.constant 0 : index
    %134 = vector.load %arg6[%c0_65, %c0_66, %c0_67] : memref<1x2x128xf32, #tpu.memory_space<vmem>>, vector<1x1x128xf32>
    %135 = vector.shape_cast %134 : vector<1x1x128xf32> to vector<1x128xf32>
    %136 = vector.shape_cast %133 : vector<1x128xf32> to vector<1x1x128xf32>
    tpu.vector_store %arg6[%c0_65, %c0_66, %c0_67], %136 {strides = array<i32>} : memref<1x2x128xf32, #tpu.memory_space<vmem>>, vector<1x1x128xf32>,
    %137 = arith.mulf %128, %128 : vector<16x128xf32>
    %cst_68 = arith.constant dense<0.000000e+00> : vector<128xf32>
    %138 = vector.multi_reduction <add>, %137, %cst_68 [0] : vector<16x128xf32> to vector<128xf32>
    %139 = vector.shape_cast %138 : vector<128xf32> to vector<1x128xf32>
    %c0_69 = arith.constant 0 : index
    %c1_70 = arith.constant 1 : index
    %c0_71 = arith.constant 0 : index
    %140 = vector.load %arg6[%c0_69, %c1_70, %c0_71] : memref<1x2x128xf32, #tpu.memory_space<vmem>>, vector<1x1x128xf32>
    %141 = vector.shape_cast %140 : vector<1x1x128xf32> to vector<1x128xf32>
    %142 = vector.shape_cast %139 : vector<1x128xf32> to vector<1x1x128xf32>
    tpu.vector_store %arg6[%c0_69, %c1_70, %c0_71], %142 {strides = array<i32>} : memref<1x2x128xf32, #tpu.memory_space<vmem>>, vector<1x1x128xf32>,
    return
  }
  func.func @transform_0(%arg0: i32) -> (i32, i32, i32) {
    %c0_i32 = arith.constant 0 : i32
    %c0_i32_0 = arith.constant 0 : i32
    %c0_i32_1 = arith.constant 0 : i32
    return %arg0, %c0_i32, %c0_i32_0 : i32, i32, i32
  }
  func.func @transform_1(%arg0: i32) -> (i32, i32) {
    %c0_i32 = arith.constant 0 : i32
    %c0_i32_0 = arith.constant 0 : i32
    %c0_i32_1 = arith.constant 0 : i32
    return %c0_i32, %c0_i32_0 : i32, i32
  }
  func.func @transform_2(%arg0: i32) -> (i32, i32) {
    %c0_i32 = arith.constant 0 : i32
    %c0_i32_0 = arith.constant 0 : i32
    %c0_i32_1 = arith.constant 0 : i32
    return %c0_i32, %c0_i32_0 : i32, i32
  }
  func.func @transform_3(%arg0: i32) -> (i32, i32) {
    %c0_i32 = arith.constant 0 : i32
    %c0_i32_0 = arith.constant 0 : i32
    %c0_i32_1 = arith.constant 0 : i32
    return %c0_i32, %c0_i32_0 : i32, i32
  }
  func.func @transform_4(%arg0: i32) -> (i32, i32, i32) {
    %c0_i32 = arith.constant 0 : i32
    %c0_i32_0 = arith.constant 0 : i32
    %c0_i32_1 = arith.constant 0 : i32
    return %arg0, %c0_i32, %c0_i32_0 : i32, i32, i32
  }
  func.func @transform_5(%arg0: i32) -> (i32, i32, i32) {
    %c0_i32 = arith.constant 0 : i32
    %c0_i32_0 = arith.constant 0 : i32
    %c0_i32_1 = arith.constant 0 : i32
    return %arg0, %c0_i32, %c0_i32_0 : i32, i32, i32
  }
}

module attributes {stable_mosaic.version = 11 : i64} {
  func.func @bn_act_pw_conv_stats_kernel(%arg0: i32, %arg1: memref<16x128xf32, #tpu.memory_space<vmem>>, %arg2: memref<1x128xf32, #tpu.memory_space<vmem>>, %arg3: memref<1x128xf32, #tpu.memory_space<vmem>>, %arg4: memref<128x128xf32, #tpu.memory_space<vmem>>, %arg5: memref<16x128xf32, #tpu.memory_space<vmem>>, %arg6: memref<1x2x128xf32, #tpu.memory_space<vmem>>) attributes {dimension_semantics = [#tpu.dimension_semantics<parallel>], iteration_bounds = array<i64: 2>, scalar_prefetch = 0 : i64, scratch_operands = 0 : i64, tpu.core_type = #tpu.core_type<tc>, window_params = [{transform_indices = @transform_0, window_bounds = array<i64: 16, 128>}, {pipeline_mode = #tpu.pipeline_mode<synchronous>, transform_indices = @transform_1, window_bounds = array<i64: 1, 128>}, {pipeline_mode = #tpu.pipeline_mode<synchronous>, transform_indices = @transform_2, window_bounds = array<i64: 1, 128>}, {pipeline_mode = #tpu.pipeline_mode<synchronous>, transform_indices = @transform_3, window_bounds = array<i64: 128, 128>}, {transform_indices = @transform_4, window_bounds = array<i64: 16, 128>}, {transform_indices = @transform_5, window_bounds = array<i64: 1, 2, 128>}]} {
    %c0 = arith.constant 0 : index
    %c0_0 = arith.constant 0 : index
    %0 = vector.load %arg1[%c0, %c0_0] : memref<16x128xf32, #tpu.memory_space<vmem>>, vector<16x128xf32>
    %c0_1 = arith.constant 0 : index
    %c0_2 = arith.constant 0 : index
    %1 = vector.load %arg2[%c0_1, %c0_2] : memref<1x128xf32, #tpu.memory_space<vmem>>, vector<1x128xf32>
    %2 = vector.broadcast %1 : vector<1x128xf32> to vector<16x128xf32>
    %3 = arith.mulf %0, %2 : vector<16x128xf32>
    %c0_3 = arith.constant 0 : index
    %c0_4 = arith.constant 0 : index
    %4 = vector.load %arg3[%c0_3, %c0_4] : memref<1x128xf32, #tpu.memory_space<vmem>>, vector<1x128xf32>
    %5 = vector.broadcast %4 : vector<1x128xf32> to vector<16x128xf32>
    %6 = arith.addf %3, %5 : vector<16x128xf32>
    %cst = arith.constant 0.000000e+00 : f32
    %cst_5 = arith.constant 6.000000e+00 : f32
    %7 = vector.broadcast %cst : f32 to vector<16x128xf32>
    %8 = arith.maximumf %7, %6 : vector<16x128xf32>
    %9 = vector.broadcast %cst_5 : f32 to vector<16x128xf32>
    %10 = arith.minimumf %9, %8 : vector<16x128xf32>
    %c0_6 = arith.constant 0 : index
    %c0_7 = arith.constant 0 : index
    %11 = vector.load %arg4[%c0_6, %c0_7] : memref<128x128xf32, #tpu.memory_space<vmem>>, vector<128x128xf32>
    %cst_8 = arith.constant dense<0.000000e+00> : vector<16x128xf32>
    %12 = tpu.matmul %10, %11, %cst_8 {dimension_numbers = #tpu.dot_dimension_numbers<[1], [0], [0], [1], [0, 0, 1, 1], [], []>} : vector<16x128xf32>, vector<128x128xf32>, vector<16x128xf32> -> vector<16x128xf32>
    %c0_9 = arith.constant 0 : index
    %c0_10 = arith.constant 0 : index
    %13 = vector.load %arg5[%c0_9, %c0_10] : memref<16x128xf32, #tpu.memory_space<vmem>>, vector<16x128xf32>
    tpu.vector_store %arg5[%c0_9, %c0_10], %12 {strides = array<i32>} : memref<16x128xf32, #tpu.memory_space<vmem>>, vector<16x128xf32>,
    %cst_11 = arith.constant dense<0.000000e+00> : vector<128xf32>
    %14 = vector.multi_reduction <add>, %12, %cst_11 [0] : vector<16x128xf32> to vector<128xf32>
    %15 = vector.shape_cast %14 : vector<128xf32> to vector<1x128xf32>
    %c0_12 = arith.constant 0 : index
    %c0_13 = arith.constant 0 : index
    %c0_14 = arith.constant 0 : index
    %16 = vector.load %arg6[%c0_12, %c0_13, %c0_14] : memref<1x2x128xf32, #tpu.memory_space<vmem>>, vector<1x1x128xf32>
    %17 = vector.shape_cast %16 : vector<1x1x128xf32> to vector<1x128xf32>
    %18 = vector.shape_cast %15 : vector<1x128xf32> to vector<1x1x128xf32>
    tpu.vector_store %arg6[%c0_12, %c0_13, %c0_14], %18 {strides = array<i32>} : memref<1x2x128xf32, #tpu.memory_space<vmem>>, vector<1x1x128xf32>,
    %19 = arith.mulf %12, %12 : vector<16x128xf32>
    %cst_15 = arith.constant dense<0.000000e+00> : vector<128xf32>
    %20 = vector.multi_reduction <add>, %19, %cst_15 [0] : vector<16x128xf32> to vector<128xf32>
    %21 = vector.shape_cast %20 : vector<128xf32> to vector<1x128xf32>
    %c0_16 = arith.constant 0 : index
    %c1 = arith.constant 1 : index
    %c0_17 = arith.constant 0 : index
    %22 = vector.load %arg6[%c0_16, %c1, %c0_17] : memref<1x2x128xf32, #tpu.memory_space<vmem>>, vector<1x1x128xf32>
    %23 = vector.shape_cast %22 : vector<1x1x128xf32> to vector<1x128xf32>
    %24 = vector.shape_cast %21 : vector<1x128xf32> to vector<1x1x128xf32>
    tpu.vector_store %arg6[%c0_16, %c1, %c0_17], %24 {strides = array<i32>} : memref<1x2x128xf32, #tpu.memory_space<vmem>>, vector<1x1x128xf32>,
    return
  }
  func.func @transform_0(%arg0: i32) -> (i32, i32) {
    %c0_i32 = arith.constant 0 : i32
    %c0_i32_0 = arith.constant 0 : i32
    return %arg0, %c0_i32 : i32, i32
  }
  func.func @transform_1(%arg0: i32) -> (i32, i32) {
    %c0_i32 = arith.constant 0 : i32
    %c0_i32_0 = arith.constant 0 : i32
    %c0_i32_1 = arith.constant 0 : i32
    return %c0_i32, %c0_i32_0 : i32, i32
  }
  func.func @transform_2(%arg0: i32) -> (i32, i32) {
    %c0_i32 = arith.constant 0 : i32
    %c0_i32_0 = arith.constant 0 : i32
    %c0_i32_1 = arith.constant 0 : i32
    return %c0_i32, %c0_i32_0 : i32, i32
  }
  func.func @transform_3(%arg0: i32) -> (i32, i32) {
    %c0_i32 = arith.constant 0 : i32
    %c0_i32_0 = arith.constant 0 : i32
    %c0_i32_1 = arith.constant 0 : i32
    return %c0_i32, %c0_i32_0 : i32, i32
  }
  func.func @transform_4(%arg0: i32) -> (i32, i32) {
    %c0_i32 = arith.constant 0 : i32
    %c0_i32_0 = arith.constant 0 : i32
    return %arg0, %c0_i32 : i32, i32
  }
  func.func @transform_5(%arg0: i32) -> (i32, i32, i32) {
    %c0_i32 = arith.constant 0 : i32
    %c0_i32_0 = arith.constant 0 : i32
    %c0_i32_1 = arith.constant 0 : i32
    return %arg0, %c0_i32, %c0_i32_0 : i32, i32, i32
  }
}

module attributes {stable_mosaic.version = 11 : i64} {
  func.func @bn_apply_kernel(%arg0: i32, %arg1: memref<16x128xf32, #tpu.memory_space<vmem>>, %arg2: memref<1x128xf32, #tpu.memory_space<vmem>>, %arg3: memref<1x128xf32, #tpu.memory_space<vmem>>, %arg4: memref<16x128xf32, #tpu.memory_space<vmem>>) attributes {dimension_semantics = [#tpu.dimension_semantics<parallel>], iteration_bounds = array<i64: 2>, scalar_prefetch = 0 : i64, scratch_operands = 0 : i64, tpu.core_type = #tpu.core_type<tc>, window_params = [{transform_indices = @transform_0, window_bounds = array<i64: 16, 128>}, {pipeline_mode = #tpu.pipeline_mode<synchronous>, transform_indices = @transform_1, window_bounds = array<i64: 1, 128>}, {pipeline_mode = #tpu.pipeline_mode<synchronous>, transform_indices = @transform_2, window_bounds = array<i64: 1, 128>}, {transform_indices = @transform_3, window_bounds = array<i64: 16, 128>}]} {
    %c0 = arith.constant 0 : index
    %c0_0 = arith.constant 0 : index
    %0 = vector.load %arg1[%c0, %c0_0] : memref<16x128xf32, #tpu.memory_space<vmem>>, vector<16x128xf32>
    %c0_1 = arith.constant 0 : index
    %c0_2 = arith.constant 0 : index
    %1 = vector.load %arg2[%c0_1, %c0_2] : memref<1x128xf32, #tpu.memory_space<vmem>>, vector<1x128xf32>
    %2 = vector.broadcast %1 : vector<1x128xf32> to vector<16x128xf32>
    %3 = arith.mulf %0, %2 : vector<16x128xf32>
    %c0_3 = arith.constant 0 : index
    %c0_4 = arith.constant 0 : index
    %4 = vector.load %arg3[%c0_3, %c0_4] : memref<1x128xf32, #tpu.memory_space<vmem>>, vector<1x128xf32>
    %5 = vector.broadcast %4 : vector<1x128xf32> to vector<16x128xf32>
    %6 = arith.addf %3, %5 : vector<16x128xf32>
    %c0_5 = arith.constant 0 : index
    %c0_6 = arith.constant 0 : index
    %7 = vector.load %arg4[%c0_5, %c0_6] : memref<16x128xf32, #tpu.memory_space<vmem>>, vector<16x128xf32>
    tpu.vector_store %arg4[%c0_5, %c0_6], %6 {strides = array<i32>} : memref<16x128xf32, #tpu.memory_space<vmem>>, vector<16x128xf32>,
    return
  }
  func.func @transform_0(%arg0: i32) -> (i32, i32) {
    %c0_i32 = arith.constant 0 : i32
    %c0_i32_0 = arith.constant 0 : i32
    return %arg0, %c0_i32 : i32, i32
  }
  func.func @transform_1(%arg0: i32) -> (i32, i32) {
    %c0_i32 = arith.constant 0 : i32
    %c0_i32_0 = arith.constant 0 : i32
    %c0_i32_1 = arith.constant 0 : i32
    return %c0_i32, %c0_i32_0 : i32, i32
  }
  func.func @transform_2(%arg0: i32) -> (i32, i32) {
    %c0_i32 = arith.constant 0 : i32
    %c0_i32_0 = arith.constant 0 : i32
    %c0_i32_1 = arith.constant 0 : i32
    return %c0_i32, %c0_i32_0 : i32, i32
  }
  func.func @transform_3(%arg0: i32) -> (i32, i32) {
    %c0_i32 = arith.constant 0 : i32
    %c0_i32_0 = arith.constant 0 : i32
    return %arg0, %c0_i32 : i32, i32
  }
}

</mosaic_0001>

<llo_original>
// kernel: tile.39
$region0: #{tile.39}
  %s0 = inlined_call_operand.vmem [shape: f32[9,16,8], index: 0, kind: input, shape index: {}]
  %s1 = inlined_call_operand.vmem [shape: f32[9,128], index: 1, kind: output, shape index: {}]
  %s2 = smov 3
  %v3 = vld [vmem:[%s0] ss:$16 sm:%s2]
  %s4 = smov 12
  %v5 = vld [vmem:[%s0] ss:$16 sm:%s4]
  %vm6 = vcmask 1043458
  %v7 = vsel %vm6, %v5, %v3
  %s8 = smov 48
  %v9 = vld [vmem:[%s0] ss:$16 sm:%s8]
  %vm10 = vcmask 1045508
  %v11 = vsel %vm10, %v9, %v7
  %s12 = smov 192
  %v13 = vld [vmem:[%s0] ss:$16 sm:%s12]
  %vm14 = vcmask 1047558
  %v15 = vsel %vm14, %v13, %v11
  %vm16 = vcmask 64512
  %17 = vst.msk [vmem:[%s1] sm:$0xff] %vm16, %v15
  %s18 = scalar_lea.vmem %s0, 128
  %v19 = vld [vmem:[%s18] sm:$0x1]
  %vm20 = vcmask 64512
  %s21 = scalar_lea.vmem %s1, 8
  %22 = vst.msk [vmem:[%s21] sm:$0x1] %vm20, %v19
  %s23 = scalar_lea.vmem %s0, 15
  %s24 = smov 3
  %v25 = vld [vmem:[%s23] ss:$16 sm:%s24]
  %s26 = scalar_lea.vmem %s0, 15
  %s27 = smov 12
  %v28 = vld [vmem:[%s26] ss:$16 sm:%s27]
  %vm29 = vcmask 1043458
  %v30 = vsel %vm29, %v28, %v25
  %s31 = scalar_lea.vmem %s0, 15
  %s32 = smov 48
  %v33 = vld [vmem:[%s31] ss:$16 sm:%s32]
  %vm34 = vcmask 1045508
  %v35 = vsel %vm34, %v33, %v30
  %s36 = scalar_lea.vmem %s0, 15
  %s37 = smov 192
  %v38 = vld [vmem:[%s36] ss:$16 sm:%s37]
  %vm39 = vcmask 1047558
  %v40 = vsel %vm39, %v38, %v35
  %41 = vrot.lane.b32.xlu0 %v40, 120
  %v42 = vpop.permute.xlu0 %41
  %vm43 = vcmask 1048512
  %44 = vst.msk [vmem:[%s1] sm:$0xff] %vm43, %v42
  %s45 = scalar_lea.vmem %s0, 143
  %v46 = vld [vmem:[%s45] sm:$0x1]
  %47 = vrot.lane.b32.xlu0 %v46, 120
  %v48 = vpop.permute.xlu0 %47
  %vm49 = vcmask 1048512
  %s50 = scalar_lea.vmem %s1, 8
  %51 = vst.msk [vmem:[%s50] sm:$0x1] %vm49, %v48
  %s52 = scalar_lea.vmem %s0, 14
  %s53 = smov 3
  %v54 = vld [vmem:[%s52] ss:$16 sm:%s53]
  %s55 = scalar_lea.vmem %s0, 14
  %s56 = smov 12
  %v57 = vld [vmem:[%s55] ss:$16 sm:%s56]
  %vm58 = vcmask 1043458
  %v59 = vsel %vm58, %v57, %v54
  %s60 = scalar_lea.vmem %s0, 14
  %s61 = smov 48
  %v62 = vld [vmem:[%s60] ss:$16 sm:%s61]
  %vm63 = vcmask 1045508
  %v64 = vsel %vm63, %v62, %v59
  %s65 = scalar_lea.vmem %s0, 14
  %s66 = smov 192
  %v67 = vld [vmem:[%s65] ss:$16 sm:%s66]
  %vm68 = vcmask 1047558
  %v69 = vsel %vm68, %v67, %v64
  %70 = vrot.lane.b32.xlu0 %v69, 112
  %v71 = vpop.permute.xlu0 %70
  %vm72 = vcmask 982912
  %73 = vst.msk [vmem:[%s1] sm:$0xff] %vm72, %v71
  %s74 = scalar_lea.vmem %s0, 142
  %v75 = vld [vmem:[%s74] sm:$0x1]
  %76 = vrot.lane.b32.xlu0 %v75, 112
  %v77 = vpop.permute.xlu0 %76
  %vm78 = vcmask 982912
  %s79 = scalar_lea.vmem %s1, 8
  %80 = vst.msk [vmem:[%s79] sm:$0x1] %vm78, %v77
  %s81 = scalar_lea.vmem %s0, 13
  %s82 = smov 3
  %v83 = vld [vmem:[%s81] ss:$16 sm:%s82]
  %s84 = scalar_lea.vmem %s0, 13
  %s85 = smov 12
  %v86 = vld [vmem:[%s84] ss:$16 sm:%s85]
  %vm87 = vcmask 1043458
  %v88 = vsel %vm87, %v86, %v83
  %s89 = scalar_lea.vmem %s0, 13
  %s90 = smov 48
  %v91 = vld [vmem:[%s89] ss:$16 sm:%s90]
  %vm92 = vcmask 1045508
  %v93 = vsel %vm92, %v91, %v88
  %s94 = scalar_lea.vmem %s0, 13
  %s95 = smov 192
  %v96 = vld [vmem:[%s94] ss:$16 sm:%s95]
  %vm97 = vcmask 1047558
  %v98 = vsel %vm97, %v96, %v93
  %99 = vrot.lane.b32.xlu0 %v98, 104
  %v100 = vpop.permute.xlu0 %99
  %vm101 = vcmask 917312
  %102 = vst.msk [vmem:[%s1] sm:$0xff] %vm101, %v100
  %s103 = scalar_lea.vmem %s0, 141
  %v104 = vld [vmem:[%s103] sm:$0x1]
  %105 = vrot.lane.b32.xlu0 %v104, 104
  %v106 = vpop.permute.xlu0 %105
  %vm107 = vcmask 917312
  %s108 = scalar_lea.vmem %s1, 8
  %109 = vst.msk [vmem:[%s108] sm:$0x1] %vm107, %v106
  %s110 = scalar_lea.vmem %s0, 12
  %s111 = smov 3
  %v112 = vld [vmem:[%s110] ss:$16 sm:%s111]
  %s113 = scalar_lea.vmem %s0, 12
  %s114 = smov 12
  %v115 = vld [vmem:[%s113] ss:$16 sm:%s114]
  %vm116 = vcmask 1043458
  %v117 = vsel %vm116, %v115, %v112
  %s118 = scalar_lea.vmem %s0, 12
  %s119 = smov 48
  %v120 = vld [vmem:[%s118] ss:$16 sm:%s119]
  %vm121 = vcmask 1045508
  %v122 = vsel %vm121, %v120, %v117
  %s123 = scalar_lea.vmem %s0, 12
  %s124 = smov 192
  %v125 = vld [vmem:[%s123] ss:$16 sm:%s124]
  %vm126 = vcmask 1047558
  %v127 = vsel %vm126, %v125, %v122
  %128 = vrot.lane.b32.xlu0 %v127, 96
  %v129 = vpop.permute.xlu0 %128
  %vm130 = vcmask 851712
  %131 = vst.msk [vmem:[%s1] sm:$0xff] %vm130, %v129
  %s132 = scalar_lea.vmem %s0, 140
  %v133 = vld [vmem:[%s132] sm:$0x1]
  %134 = vrot.lane.b32.xlu0 %v133, 96
  %v135 = vpop.permute.xlu0 %134
  %vm136 = vcmask 851712
  %s137 = scalar_lea.vmem %s1, 8
  %138 = vst.msk [vmem:[%s137] sm:$0x1] %vm136, %v135
  %s139 = scalar_lea.vmem %s0, 11
  %s140 = smov 3
  %v141 = vld [vmem:[%s139] ss:$16 sm:%s140]
  %s142 = scalar_lea.vmem %s0, 11
  %s143 = smov 12
  %v144 = vld [vmem:[%s142] ss:$16 sm:%s143]
  %vm145 = vcmask 1043458
  %v146 = vsel %vm145, %v144, %v141
  %s147 = scalar_lea.vmem %s0, 11
  %s148 = smov 48
  %v149 = vld [vmem:[%s147] ss:$16 sm:%s148]
  %vm150 = vcmask 1045508
  %v151 = vsel %vm150, %v149, %v146
  %s152 = scalar_lea.vmem %s0, 11
  %s153 = smov 192
  %v154 = vld [vmem:[%s152] ss:$16 sm:%s153]
  %vm155 = vcmask 1047558
  %v156 = vsel %vm155, %v154, %v151
  %157 = vrot.lane.b32.xlu0 %v156, 88
  %v158 = vpop.permute.xlu0 %157
  %vm159 = vcmask 786112
  %160 = vst.msk [vmem:[%s1] sm:$0xff] %vm159, %v158
  %s161 = scalar_lea.vmem %s0, 139
  %v162 = vld [vmem:[%s161] sm:$0x1]
  %163 = vrot.lane.b32.xlu0 %v162, 88
  %v164 = vpop.permute.xlu0 %163
  %vm165 = vcmask 786112
  %s166 = scalar_lea.vmem %s1, 8
  %167 = vst.msk [vmem:[%s166] sm:$0x1] %vm165, %v164
  %s168 = scalar_lea.vmem %s0, 10
  %s169 = smov 3
  %v170 = vld [vmem:[%s168] ss:$16 sm:%s169]
  %s171 = scalar_lea.vmem %s0, 10
  %s172 = smov 12
  %v173 = vld [vmem:[%s171] ss:$16 sm:%s172]
  %vm174 = vcmask 1043458
  %v175 = vsel %vm174, %v173, %v170
  %s176 = scalar_lea.vmem %s0, 10
  %s177 = smov 48
  %v178 = vld [vmem:[%s176] ss:$16 sm:%s177]
  %vm179 = vcmask 1045508
  %v180 = vsel %vm179, %v178, %v175
  %s181 = scalar_lea.vmem %s0, 10
  %s182 = smov 192
  %v183 = vld [vmem:[%s181] ss:$16 sm:%s182]
  %vm184 = vcmask 1047558
  %v185 = vsel %vm184, %v183, %v180
  %186 = vrot.lane.b32.xlu0 %v185, 80
  %v187 = vpop.permute.xlu0 %186
  %vm188 = vcmask 720512
  %189 = vst.msk [vmem:[%s1] sm:$0xff] %vm188, %v187
  %s190 = scalar_lea.vmem %s0, 138
  %v191 = vld [vmem:[%s190] sm:$0x1]
  %192 = vrot.lane.b32.xlu0 %v191, 80
  %v193 = vpop.permute.xlu0 %192
  %vm194 = vcmask 720512
  %s195 = scalar_lea.vmem %s1, 8
  %196 = vst.msk [vmem:[%s195] sm:$0x1] %vm194, %v193
  %s197 = scalar_lea.vmem %s0, 9
  %s198 = smov 3
  %v199 = vld [vmem:[%s197] ss:$16 sm:%s198]
  %s200 = scalar_lea.vmem %s0, 9
  %s201 = smov 12
  %v202 = vld [vmem:[%s200] ss:$16 sm:%s201]
  %vm203 = vcmask 1043458
  %v204 = vsel %vm203, %v202, %v199
  %s205 = scalar_lea.vmem %s0, 9
  %s206 = smov 48
  %v207 = vld [vmem:[%s205] ss:$16 sm:%s206]
  %vm208 = vcmask 1045508
  %v209 = vsel %vm208, %v207, %v204
  %s210 = scalar_lea.vmem %s0, 9
  %s211 = smov 192
  %v212 = vld [vmem:[%s210] ss:$16 sm:%s211]
  %vm213 = vcmask 1047558
  %v214 = vsel %vm213, %v212, %v209
  %215 = vrot.lane.b32.xlu0 %v214, 72
  %v216 = vpop.permute.xlu0 %215
  %vm217 = vcmask 654912
  %218 = vst.msk [vmem:[%s1] sm:$0xff] %vm217, %v216
  %s219 = scalar_lea.vmem %s0, 137
  %v220 = vld [vmem:[%s219] sm:$0x1]
  %221 = vrot.lane.b32.xlu0 %v220, 72
  %v222 = vpop.permute.xlu0 %221
  %vm223 = vcmask 654912
  %s224 = scalar_lea.vmem %s1, 8
  %225 = vst.msk [vmem:[%s224] sm:$0x1] %vm223, %v222
  %s226 = scalar_lea.vmem %s0, 8
  %s227 = smov 3
  %v228 = vld [vmem:[%s226] ss:$16 sm:%s227]
  %s229 = scalar_lea.vmem %s0, 8
  %s230 = smov 12
  %v231 = vld [vmem:[%s229] ss:$16 sm:%s230]
  %vm232 = vcmask 1043458
  %v233 = vsel %vm232, %v231, %v228
  %s234 = scalar_lea.vmem %s0, 8
  %s235 = smov 48
  %v236 = vld [vmem:[%s234] ss:$16 sm:%s235]
  %vm237 = vcmask 1045508
  %v238 = vsel %vm237, %v236, %v233
  %s239 = scalar_lea.vmem %s0, 8
  %s240 = smov 192
  %v241 = vld [vmem:[%s239] ss:$16 sm:%s240]
  %vm242 = vcmask 1047558
  %v243 = vsel %vm242, %v241, %v238
  %244 = vrot.lane.b32.xlu0 %v243, 64
  %v245 = vpop.permute.xlu0 %244
  %vm246 = vcmask 589312
  %247 = vst.msk [vmem:[%s1] sm:$0xff] %vm246, %v245
  %s248 = scalar_lea.vmem %s0, 136
  %v249 = vld [vmem:[%s248] sm:$0x1]
  %250 = vrot.lane.b32.xlu0 %v249, 64
  %v251 = vpop.permute.xlu0 %250
  %vm252 = vcmask 589312
  %s253 = scalar_lea.vmem %s1, 8
  %254 = vst.msk [vmem:[%s253] sm:$0x1] %vm252, %v251
  %s255 = scalar_lea.vmem %s0, 7
  %s256 = smov 3
  %v257 = vld [vmem:[%s255] ss:$16 sm:%s256]
  %s258 = scalar_lea.vmem %s0, 7
  %s259 = smov 12
  %v260 = vld [vmem:[%s258] ss:$16 sm:%s259]
  %vm261 = vcmask 1043458
  %v262 = vsel %vm261, %v260, %v257
  %s263 = scalar_lea.vmem %s0, 7
  %s264 = smov 48
  %v265 = vld [vmem:[%s263] ss:$16 sm:%s264]
  %vm266 = vcmask 1045508
  %v267 = vsel %vm266, %v265, %v262
  %s268 = scalar_lea.vmem %s0, 7
  %s269 = smov 192
  %v270 = vld [vmem:[%s268] ss:$16 sm:%s269]
  %vm271 = vcmask 1047558
  %v272 = vsel %vm271, %v270, %v267
  %273 = vrot.lane.b32.xlu0 %v272, 56
  %v274 = vpop.permute.xlu0 %273
  %vm275 = vcmask 523712
  %276 = vst.msk [vmem:[%s1] sm:$0xff] %vm275, %v274
  %s277 = scalar_lea.vmem %s0, 135
  %v278 = vld [vmem:[%s277] sm:$0x1]
  %279 = vrot.lane.b32.xlu0 %v278, 56
  %v280 = vpop.permute.xlu0 %279
  %vm281 = vcmask 523712
  %s282 = scalar_lea.vmem %s1, 8
  %283 = vst.msk [vmem:[%s282] sm:$0x1] %vm281, %v280
  %s284 = scalar_lea.vmem %s0, 6
  %s285 = smov 3
  %v286 = vld [vmem:[%s284] ss:$16 sm:%s285]
  %s287 = scalar_lea.vmem %s0, 6
  %s288 = smov 12
  %v289 = vld [vmem:[%s287] ss:$16 sm:%s288]
  %vm290 = vcmask 1043458
  %v291 = vsel %vm290, %v289, %v286
  %s292 = scalar_lea.vmem %s0, 6
  %s293 = smov 48
  %v294 = vld [vmem:[%s292] ss:$16 sm:%s293]
  %vm295 = vcmask 1045508
  %v296 = vsel %vm295, %v294, %v291
  %s297 = scalar_lea.vmem %s0, 6
  %s298 = smov 192
  %v299 = vld [vmem:[%s297] ss:$16 sm:%s298]
  %vm300 = vcmask 1047558
  %v301 = vsel %vm300, %v299, %v296
  %302 = vrot.lane.b32.xlu0 %v301, 48
  %v303 = vpop.permute.xlu0 %302
  %vm304 = vcmask 458112
  %305 = vst.msk [vmem:[%s1] sm:$0xff] %vm304, %v303
  %s306 = scalar_lea.vmem %s0, 134
  %v307 = vld [vmem:[%s306] sm:$0x1]
  %308 = vrot.lane.b32.xlu0 %v307, 48
  %v309 = vpop.permute.xlu0 %308
  %vm310 = vcmask 458112
  %s311 = scalar_lea.vmem %s1, 8
  %312 = vst.msk [vmem:[%s311] sm:$0x1] %vm310, %v309
  %s313 = scalar_lea.vmem %s0, 5
  %s314 = smov 3
  %v315 = vld [vmem:[%s313] ss:$16 sm:%s314]
  %s316 = scalar_lea.vmem %s0, 5
  %s317 = smov 12
  %v318 = vld [vmem:[%s316] ss:$16 sm:%s317]
  %vm319 = vcmask 1043458
  %v320 = vsel %vm319, %v318, %v315
  %s321 = scalar_lea.vmem %s0, 5
  %s322 = smov 48
  %v323 = vld [vmem:[%s321] ss:$16 sm:%s322]
  %vm324 = vcmask 1045508
  %v325 = vsel %vm324, %v323, %v320
  %s326 = scalar_lea.vmem %s0, 5
  %s327 = smov 192
  %v328 = vld [vmem:[%s326] ss:$16 sm:%s327]
  %vm329 = vcmask 1047558
  %v330 = vsel %vm329, %v328, %v325
  %331 = vrot.lane.b32.xlu0 %v330, 40
  %v332 = vpop.permute.xlu0 %331
  %vm333 = vcmask 392512
  %334 = vst.msk [vmem:[%s1] sm:$0xff] %vm333, %v332
  %s335 = scalar_lea.vmem %s0, 133
  %v336 = vld [vmem:[%s335] sm:$0x1]
  %337 = vrot.lane.b32.xlu0 %v336, 40
  %v338 = vpop.permute.xlu0 %337
  %vm339 = vcmask 392512
  %s340 = scalar_lea.vmem %s1, 8
  %341 = vst.msk [vmem:[%s340] sm:$0x1] %vm339, %v338
  %s342 = scalar_lea.vmem %s0, 4
  %s343 = smov 3
  %v344 = vld [vmem:[%s342] ss:$16 sm:%s343]
  %s345 = scalar_lea.vmem %s0, 4
  %s346 = smov 12
  %v347 = vld [vmem:[%s345] ss:$16 sm:%s346]
  %vm348 = vcmask 1043458
  %v349 = vsel %vm348, %v347, %v344
  %s350 = scalar_lea.vmem %s0, 4
  %s351 = smov 48
  %v352 = vld [vmem:[%s350] ss:$16 sm:%s351]
  %vm353 = vcmask 1045508
  %v354 = vsel %vm353, %v352, %v349
  %s355 = scalar_lea.vmem %s0, 4
  %s356 = smov 192
  %v357 = vld [vmem:[%s355] ss:$16 sm:%s356]
  %vm358 = vcmask 1047558
  %v359 = vsel %vm358, %v357, %v354
  %360 = vrot.lane.b32.xlu0 %v359, 32
  %v361 = vpop.permute.xlu0 %360
  %vm362 = vcmask 326912
  %363 = vst.msk [vmem:[%s1] sm:$0xff] %vm362, %v361
  %s364 = scalar_lea.vmem %s0, 132
  %v365 = vld [vmem:[%s364] sm:$0x1]
  %366 = vrot.lane.b32.xlu0 %v365, 32
  %v367 = vpop.permute.xlu0 %366
  %vm368 = vcmask 326912
  %s369 = scalar_lea.vmem %s1, 8
  %370 = vst.msk [vmem:[%s369] sm:$0x1] %vm368, %v367
  %s371 = scalar_lea.vmem %s0, 3
  %s372 = smov 3
  %v373 = vld [vmem:[%s371] ss:$16 sm:%s372]
  %s374 = scalar_lea.vmem %s0, 3
  %s375 = smov 12
  %v376 = vld [vmem:[%s374] ss:$16 sm:%s375]
  %vm377 = vcmask 1043458
  %v378 = vsel %vm377, %v376, %v373
  %s379 = scalar_lea.vmem %s0, 3
  %s380 = smov 48
  %v381 = vld [vmem:[%s379] ss:$16 sm:%s380]
  %vm382 = vcmask 1045508
  %v383 = vsel %vm382, %v381, %v378
  %s384 = scalar_lea.vmem %s0, 3
  %s385 = smov 192
  %v386 = vld [vmem:[%s384] ss:$16 sm:%s385]
  %vm387 = vcmask 1047558
  %v388 = vsel %vm387, %v386, %v383
  %389 = vrot.lane.b32.xlu0 %v388, 24
  %v390 = vpop.permute.xlu0 %389
  %vm391 = vcmask 261312
  %392 = vst.msk [vmem:[%s1] sm:$0xff] %vm391, %v390
  %s393 = scalar_lea.vmem %s0, 131
  %v394 = vld [vmem:[%s393] sm:$0x1]
  %395 = vrot.lane.b32.xlu0 %v394, 24
  %v396 = vpop.permute.xlu0 %395
  %vm397 = vcmask 261312
  %s398 = scalar_lea.vmem %s1, 8
  %399 = vst.msk [vmem:[%s398] sm:$0x1] %vm397, %v396
  %s400 = scalar_lea.vmem %s0, 2
  %s401 = smov 3
  %v402 = vld [vmem:[%s400] ss:$16 sm:%s401]
  %s403 = scalar_lea.vmem %s0, 2
  %s404 = smov 12
  %v405 = vld [vmem:[%s403] ss:$16 sm:%s404]
  %vm406 = vcmask 1043458
  %v407 = vsel %vm406, %v405, %v402
  %s408 = scalar_lea.vmem %s0, 2
  %s409 = smov 48
  %v410 = vld [vmem:[%s408] ss:$16 sm:%s409]
  %vm411 = vcmask 1045508
  %v412 = vsel %vm411, %v410, %v407
  %s413 = scalar_lea.vmem %s0, 2
  %s414 = smov 192
  %v415 = vld [vmem:[%s413] ss:$16 sm:%s414]
  %vm416 = vcmask 1047558
  %v417 = vsel %vm416, %v415, %v412
  %418 = vrot.lane.b32.xlu0 %v417, 16
  %v419 = vpop.permute.xlu0 %418
  %vm420 = vcmask 195712
  %421 = vst.msk [vmem:[%s1] sm:$0xff] %vm420, %v419
  %s422 = scalar_lea.vmem %s0, 130
  %v423 = vld [vmem:[%s422] sm:$0x1]
  %424 = vrot.lane.b32.xlu0 %v423, 16
  %v425 = vpop.permute.xlu0 %424
  %vm426 = vcmask 195712
  %s427 = scalar_lea.vmem %s1, 8
  %428 = vst.msk [vmem:[%s427] sm:$0x1] %vm426, %v425
  %s429 = scalar_lea.vmem %s0, 1
  %s430 = smov 3
  %v431 = vld [vmem:[%s429] ss:$16 sm:%s430]
  %s432 = scalar_lea.vmem %s0, 1
  %s433 = smov 12
  %v434 = vld [vmem:[%s432] ss:$16 sm:%s433]
  %vm435 = vcmask 1043458
  %v436 = vsel %vm435, %v434, %v431
  %s437 = scalar_lea.vmem %s0, 1
  %s438 = smov 48
  %v439 = vld [vmem:[%s437] ss:$16 sm:%s438]
  %vm440 = vcmask 1045508
  %v441 = vsel %vm440, %v439, %v436
  %s442 = scalar_lea.vmem %s0, 1
  %s443 = smov 192
  %v444 = vld [vmem:[%s442] ss:$16 sm:%s443]
  %vm445 = vcmask 1047558
  %v446 = vsel %vm445, %v444, %v441
  %447 = vrot.lane.b32.xlu0 %v446, 8
  %v448 = vpop.permute.xlu0 %447
  %vm449 = vcmask 130112
  %450 = vst.msk [vmem:[%s1] sm:$0xff] %vm449, %v448
  %s451 = scalar_lea.vmem %s0, 129
  %v452 = vld [vmem:[%s451] sm:$0x1]
  %453 = vrot.lane.b32.xlu0 %v452, 8
  %v454 = vpop.permute.xlu0 %453
  %vm455 = vcmask 130112
  %s456 = scalar_lea.vmem %s1, 8
  %457 = vst.msk [vmem:[%s456] sm:$0x1] %vm455, %v454

// kernel: tile.43
$region0: #{tile.43}
  #allocation0 [shape = 's32[1]{0}', space=sflag, size = 0x4, scoped, tag = 'scoped memory for tile.43']
  %s0 = inlined_call_operand.vmem [shape: f32[8], index: 0, kind: input, shape index: {}]
  %s1 = inlined_call_operand.vmem [shape: f32[16,8], index: 1, kind: output, shape index: {}]
  // Predicated region
  $region2: #{tile.43} parent=0 // pred_check
    _
  $region3: #{tile.43} parent=0 // pred_check_branch
    %3 = sbr.rel (0) target = $region5
  $region4: #{tile.43} parent=0 // pred_region
    _
  $region5: #{tile.43} parent=0 // pred_fallthru
    _
  %v4 = vld [vmem:[%s0] ss:$0 sm:$0xff]
  %5 = vst [vmem:[%s1] sm:$0xff] %v4
  %s6 = scalar_lea.vmem %s1, 8
  %7 = vst [vmem:[%s6] sm:$0xff] %v4

// kernel: tile.44
$region0: #{tile.44}
  %s0 = inlined_call_operand.vmem [shape: f32[16,8], index: 0, kind: input, shape index: {}]
  %s1 = inlined_call_operand.vmem [shape: f32[1,128], index: 1, kind: output, shape index: {}]
  $region1: #{tile.44} parent=0
    #allocation0 [shape = 'u8[4096]{0}', space=vmem, size = 0x1000, scoped, tag = 'scoped mem for output reshape']
    %v2 = vld [vmem:[%s0] sm:$0x1]
    %vm3 = vcmask 64512
    %4 = vst.msk [vmem:[#allocation0] sm:$0x1] %vm3, %v2
    %s5 = scalar_lea.vmem %s0, 15
    %v6 = vld [vmem:[%s5] sm:$0x1]
    %7 = vrot.lane.b32.xlu0 %v6, 120
    %v8 = vpop.permute.xlu0 %7
    %vm9 = vcmask 1048512
    %10 = vst.msk [vmem:[#allocation0] sm:$0x1] %vm9, %v8
    %s11 = scalar_lea.vmem %s0, 14
    %v12 = vld [vmem:[%s11] sm:$0x1]
    %13 = vrot.lane.b32.xlu0 %v12, 112
    %v14 = vpop.permute.xlu0 %13
    %vm15 = vcmask 982912
    %16 = vst.msk [vmem:[#allocation0] sm:$0x1] %vm15, %v14
    %s17 = scalar_lea.vmem %s0, 13
    %v18 = vld [vmem:[%s17] sm:$0x1]
    %19 = vrot.lane.b32.xlu0 %v18, 104
    %v20 = vpop.permute.xlu0 %19
    %vm21 = vcmask 917312
    %22 = vst.msk [vmem:[#allocation0] sm:$0x1] %vm21, %v20
    %s23 = scalar_lea.vmem %s0, 12
    %v24 = vld [vmem:[%s23] sm:$0x1]
    %25 = vrot.lane.b32.xlu0 %v24, 96
    %v26 = vpop.permute.xlu0 %25
    %vm27 = vcmask 851712
    %28 = vst.msk [vmem:[#allocation0] sm:$0x1] %vm27, %v26
    %s29 = scalar_lea.vmem %s0, 11
    %v30 = vld [vmem:[%s29] sm:$0x1]
    %31 = vrot.lane.b32.xlu0 %v30, 88
    %v32 = vpop.permute.xlu0 %31
    %vm33 = vcmask 786112
    %34 = vst.msk [vmem:[#allocation0] sm:$0x1] %vm33, %v32
    %s35 = scalar_lea.vmem %s0, 10
    %v36 = vld [vmem:[%s35] sm:$0x1]
    %37 = vrot.lane.b32.xlu0 %v36, 80
    %v38 = vpop.permute.xlu0 %37
    %vm39 = vcmask 720512
    %40 = vst.msk [vmem:[#allocation0] sm:$0x1] %vm39, %v38
    %s41 = scalar_lea.vmem %s0, 9
    %v42 = vld [vmem:[%s41] sm:$0x1]
    %43 = vrot.lane.b32.xlu0 %v42, 72
    %v44 = vpop.permute.xlu0 %43
    %vm45 = vcmask 654912
    %46 = vst.msk [vmem:[#allocation0] sm:$0x1] %vm45, %v44
    %s47 = scalar_lea.vmem %s0, 8
    %v48 = vld [vmem:[%s47] sm:$0x1]
    %49 = vrot.lane.b32.xlu0 %v48, 64
    %v50 = vpop.permute.xlu0 %49
    %vm51 = vcmask 589312
    %52 = vst.msk [vmem:[#allocation0] sm:$0x1] %vm51, %v50
    %s53 = scalar_lea.vmem %s0, 7
    %v54 = vld [vmem:[%s53] sm:$0x1]
    %55 = vrot.lane.b32.xlu0 %v54, 56
    %v56 = vpop.permute.xlu0 %55
    %vm57 = vcmask 523712
    %58 = vst.msk [vmem:[#allocation0] sm:$0x1] %vm57, %v56
    %s59 = scalar_lea.vmem %s0, 6
    %v60 = vld [vmem:[%s59] sm:$0x1]
    %61 = vrot.lane.b32.xlu0 %v60, 48
    %v62 = vpop.permute.xlu0 %61
    %vm63 = vcmask 458112
    %64 = vst.msk [vmem:[#allocation0] sm:$0x1] %vm63, %v62
    %s65 = scalar_lea.vmem %s0, 5
    %v66 = vld [vmem:[%s65] sm:$0x1]
    %67 = vrot.lane.b32.xlu0 %v66, 40
    %v68 = vpop.permute.xlu0 %67
    %vm69 = vcmask 392512
    %70 = vst.msk [vmem:[#allocation0] sm:$0x1] %vm69, %v68
    %s71 = scalar_lea.vmem %s0, 4
    %v72 = vld [vmem:[%s71] sm:$0x1]
    %73 = vrot.lane.b32.xlu0 %v72, 32
    %v74 = vpop.permute.xlu0 %73
    %vm75 = vcmask 326912
    %76 = vst.msk [vmem:[#allocation0] sm:$0x1] %vm75, %v74
    %s77 = scalar_lea.vmem %s0, 3
    %v78 = vld [vmem:[%s77] sm:$0x1]
    %79 = vrot.lane.b32.xlu0 %v78, 24
    %v80 = vpop.permute.xlu0 %79
    %vm81 = vcmask 261312
    %82 = vst.msk [vmem:[#allocation0] sm:$0x1] %vm81, %v80
    %s83 = scalar_lea.vmem %s0, 2
    %v84 = vld [vmem:[%s83] sm:$0x1]
    %85 = vrot.lane.b32.xlu0 %v84, 16
    %v86 = vpop.permute.xlu0 %85
    %vm87 = vcmask 195712
    %88 = vst.msk [vmem:[#allocation0] sm:$0x1] %vm87, %v86
    %s89 = scalar_lea.vmem %s0, 1
    %v90 = vld [vmem:[%s89] sm:$0x1]
    %91 = vrot.lane.b32.xlu0 %v90, 8
    %v92 = vpop.permute.xlu0 %91
    %vm93 = vcmask 130112
    %94 = vst.msk [vmem:[#allocation0] sm:$0x1] %vm93, %v92
    %s96 = sshll.u32 1, 1
    %s97 = ssub.s32 %s96, 1
    %v99 = vld [vmem:[#allocation0] sm:%s97]
    %s100 = sshll.u32 1, 1
    %s101 = ssub.s32 %s100, 1
    %102 = vst [vmem:[%s1] sm:%s101] %v99

// kernel: mobilenet_block.4
$region0: #{mobilenet_block.4}
  #allocation0 [shape = 'u32[]', space=smem, size = 0x4, offset = 0x4, fixed_abs, tag = 'smem constant byte address 0x4 - core index']
  #allocation1 [shape = 'u32[144,128]{1,0:T(1,128)}', space=vmem, size = 0x12000, scoped, tag = 'internal scratch']
  %s0 = inlined_call_operand.vmem [shape: f32[32,64], index: 0, kind: input, shape index: {}]
  %s1 = inlined_call_operand.vmem [shape: f32[64,128], index: 1, kind: input, shape index: {}]
  %s2 = inlined_call_operand.vmem [shape: f32[32,128], index: 2, kind: output, shape index: {0}]
  %s3 = inlined_call_operand.vmem [shape: f32[2,2,128], index: 3, kind: output, shape index: {1}]
  %4 = xla_tuple %s2, %s3
  %s5 = sld [smem:[#allocation0]]
  $region49: #{mobilenet_block.4} parent=0
    _
  %s7 = ssub.s32 1, %s5
  %s8 = scalar_select 0, %s7, %s5
  loop: start=0, step=1, limit=4
  $region2: #{mobilenet_block.4} parent=0 // loop_pre_header
    _
  $region3: #{mobilenet_block.4} parent=0 // loop_header
    %s10 = sphi 0, %s14
    %p11 = scmp.ge.s32.totalorder %s10, 4
    %s20 = sphi 0, %s22
    %s23 = sphi 0, %s20
    %s24 = sphi 0, %s23
    %s40 = sphi 0, %s24
    %s44 = sphi 0, %s44
    %s46 = sphi 0, %s44
    %s47 = sphi 0, %s46
    %s61 = sphi 0, %s47
    %s67 = sphi 0, %s69
    %s70 = sphi 0, %s67
    %s71 = sphi 0, %s70
    %s87 = sphi 0, %s71
    %s93 = sphi 0, %s95
    %s96 = sphi 0, %s93
    %s97 = sphi 0, %s96
    %s113 = sphi 0, %s97
  $region4: #{mobilenet_block.4} parent=0 // loop_header_branch
    %13 = sbr.rel (%p11) target = $region8
  $region5: #{mobilenet_block.4} parent=0 // loop_body
    %s15 = ssub.s32 %s10, 1
    %s16 = ssub.s32 %s10, 2
    %s17 = sadd.s32 %s10, 1
    %s18 = ssub.s32 %s10, %s17
    %p19 = scmp.eq.s32.totalorder %s18, 0
    %s21 = sadd.s32 %s20, 1
    %s22 = scalar_select %p19, %s20, %s21
    %p25 = pneg %p19
    %p26 = scmp.eq.s32.totalorder %s10, 1
    %p27 = por %p25, %p26
    %p28 = scmp.ne.s32.totalorder %s20, %s23
    %p29 = scmp.eq.s32.totalorder %s10, 0
    %p30 = por %p28, %p29
    %p31 = scmp.ne.s32.totalorder %s20, %s23
    %p32 = scmp.eq.s32.totalorder %s15, 1
    %p33 = por %p31, %p32
    %p34 = scmp.ne.s32.totalorder %s23, %s24
    %p35 = scmp.eq.s32.totalorder %s15, 0
    %p36 = por %p34, %p35
    %p37 = scmp.ne.s32.totalorder %s23, %s24
    %p38 = scmp.eq.s32.totalorder %s16, 1
    %p39 = por %p37, %p38
    %p41 = scmp.ne.s32.totalorder %s24, %s40
    %p42 = scmp.eq.s32.totalorder %s16, 0
    %p43 = por %p41, %p42
    %s45 = sadd.s32 %s44, 1
    %p48 = scmp.eq.s32.totalorder %s10, 1
    %p49 = scmp.ne.s32.totalorder %s44, %s46
    %p50 = scmp.eq.s32.totalorder %s10, 0
    %p51 = por %p49, %p50
    %p52 = scmp.ne.s32.totalorder %s44, %s46
    %p53 = scmp.eq.s32.totalorder %s15, 1
    %p54 = por %p52, %p53
    %p55 = scmp.ne.s32.totalorder %s46, %s47
    %p56 = scmp.eq.s32.totalorder %s15, 0
    %p57 = por %p55, %p56
    %p58 = scmp.ne.s32.totalorder %s46, %s47
    %p59 = scmp.eq.s32.totalorder %s16, 1
    %p60 = por %p58, %p59
    %p62 = scmp.ne.s32.totalorder %s47, %s61
    %p63 = scmp.eq.s32.totalorder %s16, 0
    %p64 = por %p62, %p63
    %s65 = ssub.s32 %s10, %s17
    %p66 = scmp.eq.s32.totalorder %s65, 0
    %s68 = sadd.s32 %s67, 1
    %s69 = scalar_select %p66, %s67, %s68
    %p72 = pneg %p66
    %p73 = scmp.eq.s32.totalorder %s10, 1
    %p74 = por %p72, %p73
    %p75 = scmp.ne.s32.totalorder %s67, %s70
    %p76 = scmp.eq.s32.totalorder %s10, 0
    %p77 = por %p75, %p76
    %p78 = scmp.ne.s32.totalorder %s67, %s70
    %p79 = scmp.eq.s32.totalorder %s15, 1
    %p80 = por %p78, %p79
    %p81 = scmp.ne.s32.totalorder %s70, %s71
    %p82 = scmp.eq.s32.totalorder %s15, 0
    %p83 = por %p81, %p82
    %p84 = scmp.ne.s32.totalorder %s70, %s71
    %p85 = scmp.eq.s32.totalorder %s16, 1
    %p86 = por %p84, %p85
    %p88 = scmp.ne.s32.totalorder %s71, %s87
    %p89 = scmp.eq.s32.totalorder %s16, 0
    %p90 = por %p88, %p89
    %s91 = ssub.s32 %s10, %s17
    %p92 = scmp.eq.s32.totalorder %s91, 0
    %s94 = sadd.s32 %s93, 1
    %s95 = scalar_select %p92, %s93, %s94
    %p98 = pneg %p92
    %p99 = scmp.eq.s32.totalorder %s10, 1
    %p100 = por %p98, %p99
    %p101 = scmp.ne.s32.totalorder %s93, %s96
    %p102 = scmp.eq.s32.totalorder %s10, 0
    %p103 = por %p101, %p102
    %p104 = scmp.ne.s32.totalorder %s93, %s96
    %p105 = scmp.eq.s32.totalorder %s15, 1
    %p106 = por %p104, %p105
    %p107 = scmp.ne.s32.totalorder %s96, %s97
    %p108 = scmp.eq.s32.totalorder %s15, 0
    %p109 = por %p107, %p108
    %p110 = scmp.ne.s32.totalorder %s96, %s97
    %p111 = scmp.eq.s32.totalorder %s16, 1
    %p112 = por %p110, %p111
    %p114 = scmp.ne.s32.totalorder %s97, %s113
    %p115 = scmp.eq.s32.totalorder %s16, 0
    %p116 = por %p114, %p115
    %p117 = scmp.le.s32.totalorder 1, %s10
    %p118 = scmp.lt.s32.totalorder %s10, 3
    %p119 = pnand %p117, %p118
    %p120 = pneg %p119
    // Predicated region
    $region9: #{mobilenet_block.4} parent=5 // pred_check
      _
    $region10: #{mobilenet_block.4} parent=5 // pred_check_branch
      %122 = sbr.rel (%p119) target = $region12
    $region11: #{mobilenet_block.4} parent=5 // pred_region
      %s123 = ssub.s32 %s10, 1
      // Predicated region
      $region13: #{mobilenet_block.4} parent=11 // pred_check
        %p124 = pneg %p57
      $region14: #{mobilenet_block.4} parent=11 // pred_check_branch
        %126 = sbr.rel (%p124) target = $region16
      $region15: #{mobilenet_block.4} parent=11 // pred_region
        _
      $region16: #{mobilenet_block.4} parent=11 // pred_fallthru
        _
    $region12: #{mobilenet_block.4} parent=5 // pred_fallthru
      _
    %p127 = scmp.lt.s32.totalorder %s10, 2
    // Predicated region
    $region17: #{mobilenet_block.4} parent=5 // pred_check
      %p128 = pneg %p127
    $region18: #{mobilenet_block.4} parent=5 // pred_check_branch
      %130 = sbr.rel (%p128) target = $region20
    $region19: #{mobilenet_block.4} parent=5 // pred_region
      // Predicated region
      $region21: #{mobilenet_block.4} parent=19 // pred_check
        %p131 = pneg %p30
      $region22: #{mobilenet_block.4} parent=19 // pred_check_branch
        %133 = sbr.rel (%p131) target = $region24
      $region23: #{mobilenet_block.4} parent=19 // pred_region
        %s134 = smul.u32 2, %s10
        %p135 = scmp.lt.s32.totalorder %s134, 3
        %s136 = scalar_select %p135, %s134, 3
        %s137 = smul.addr %s136, 8
        %s138 = scalar_lea.vmem %s0, %s137
        %s139 = smul.u32 2, %s10
      $region24: #{mobilenet_block.4} parent=19 // pred_fallthru
        _
    $region20: #{mobilenet_block.4} parent=5 // pred_fallthru
      _
    %p140 = scmp.le.s32.totalorder 1, %s10
    %p141 = scmp.lt.s32.totalorder %s10, 3
    %p142 = pnand %p140, %p141
    %p143 = pneg %p142
    // Predicated region
    $region25: #{mobilenet_block.4} parent=5 // pred_check
      _
    $region26: #{mobilenet_block.4} parent=5 // pred_check_branch
      %145 = sbr.rel (%p142) target = $region28
    $region27: #{mobilenet_block.4} parent=5 // pred_region
      %s146 = ssub.s32 %s10, 1
      %s147 = smul.u32 2, %s15
      %p148 = scmp.lt.s32.totalorder %s147, 3
      %s149 = scalar_select %p148, %s147, 3
      %s150 = smul.addr %s149, 8
      %s151 = scalar_lea.vmem %s0, %s150
      %p152 = pneg %p36
      %p153 = pneg %p33
      %p154 = pneg %p57
      %p155 = pneg %p54
      %p156 = pneg %p83
      %p157 = pneg %p80
      %s158 = smul.u32 2, %s15
      %p159 = scmp.lt.s32.totalorder %s158, 3
      %s160 = scalar_select %p159, %s158, 3
      %s161 = smul.addr %s160, 8
      %s162 = scalar_lea.vmem %s2, %s161
      %p163 = pneg %p109
      %p164 = pneg %p106
      %p165 = scmp.lt.s32.totalorder %s15, 1
      %s166 = scalar_select %p165, %s15, 1
      %s167 = smul.addr %s166, 2
      %s168 = scalar_lea.vmem %s3, %s167
      %s169 = smul.u32 2, %s15
      %p170 = scmp.lt.s32.totalorder %s169, 3
      %s171 = scalar_select %p170, %s169, 3
      %s172 = smul.addr %s171, 8
      %s173 = scalar_lea.vmem %s0, %s172
      %s174 = smul.u32 2, %s15
      %s175 = smul.u32 2, %s15
      %p176 = scmp.lt.s32.totalorder %s175, 3
      %s177 = scalar_select %p176, %s175, 3
      %s178 = smul.addr %s177, 8
      %s179 = scalar_lea.vmem %s2, %s178
      %s180 = smul.u32 2, %s15
      %p181 = scmp.lt.s32.totalorder %s15, 1
      %s182 = scalar_select %p181, %s15, 1
      %s183 = smul.addr %s182, 2
      %s184 = scalar_lea.vmem %s3, %s183
      %v185 = vld [vmem:[%s173] sm:$0xff]
      %v186 = vld [vmem:[%s173 + $0x8] sm:$0xff]
      %v187 = vld [vmem:[%s1] sm:$0xff]
      %v188 = vld [vmem:[%s1 + $0x8] sm:$0xff]
      %v189 = vld [vmem:[%s1 + $0x10] sm:$0xff]
      %v190 = vld [vmem:[%s1 + $0x18] sm:$0xff]
      %v191 = vld [vmem:[%s1 + $0x20] sm:$0xff]
      %v192 = vld [vmem:[%s1 + $0x28] sm:$0xff]
      %v193 = vld [vmem:[%s1 + $0x30] sm:$0xff]
      %v194 = vld [vmem:[%s1 + $0x38] sm:$0xff]
      %vm195 = vcmask 523264
      %v197 = vsel %vm195, %v185, 0
      %v200 = vsel %vm195, %v186, 0
      %202 = vmatprep.subr.mxu0 0.0
      %203 = vmatpush1.msra.mxu0 0.0
      %204 = vmatprep.subr.mxu0 0.0
      %205 = vmatpush1.msra.mxu0 0.0
      %206 = vmatprep.subr.mxu0 0.0
      %207 = vmatpush1.msra.mxu0 0.0
      %208 = vmatprep.subr.mxu0 0.0
      %209 = vmatpush1.msra.mxu0 0.0
      %210 = vmatprep.subr.mxu0 0.0
      %211 = vmatpush1.msra.mxu0 0.0
      %212 = vmatprep.subr.mxu0 0.0
      %213 = vmatpush1.msra.mxu0 0.0
      %214 = vmatprep.subr.mxu0 0.0
      %215 = vmatpush1.msra.mxu0 0.0
      %216 = vmatprep.subr.mxu0 0.0
      %217 = vmatpush1.msra.mxu0 0.0
      %218 = vmatprep.subr.mxu0 0.0
      %219 = vmatpush1.msra.mxu0 %v194
      %220 = vmatprep.subr.mxu0 0.0
      %221 = vmatpush1.msra.mxu0 %v193
      %222 = vmatprep.subr.mxu0 0.0
      %223 = vmatpush1.msra.mxu0 %v192
      %224 = vmatprep.subr.mxu0 0.0
      %225 = vmatpush1.msra.mxu0 %v191
      %226 = vmatprep.subr.mxu0 0.0
      %227 = vmatpush1.msra.mxu0 %v190
      %228 = vmatprep.subr.mxu0 0.0
      %229 = vmatpush1.msra.mxu0 %v189
      %230 = vmatprep.subr.mxu0 0.0
      %231 = vmatpush1.msra.mxu0 %v188
      %232 = vmatprep.subr.mxu0 0.0
      %233 = vmatpush1.msra.mxu0 %v187
      %234 = vmatprep.subr.mxu0 0.0
      %235 = vmatpush2.msra.mxu0 0.0
      %236 = vmatprep.subr.mxu0 0.0
      %237 = vmatpush2.msra.mxu0 0.0
      %238 = vmatprep.subr.mxu0 0.0
      %239 = vmatpush2.msra.mxu0 0.0
      %240 = vmatprep.subr.mxu0 0.0
      %241 = vmatpush2.msra.mxu0 0.0
      %242 = vmatprep.subr.mxu0 0.0
      %243 = vmatpush2.msra.mxu0 0.0
      %244 = vmatprep.subr.mxu0 0.0
      %245 = vmatpush2.msra.mxu0 0.0
      %246 = vmatprep.subr.mxu0 0.0
      %247 = vmatpush2.msra.mxu0 0.0
      %248 = vmatprep.subr.mxu0 0.0
      %249 = vmatpush2.msra.mxu0 0.0
      %250 = vmatprep.subr.mxu0 0.0
      %251 = vmatpush2.msra.mxu0 0.0
      %252 = vmatprep.subr.mxu0 0.0
      %253 = vmatpush2.msra.mxu0 0.0
      %254 = vmatprep.subr.mxu0 0.0
      %255 = vmatpush2.msra.mxu0 0.0
      %256 = vmatprep.subr.mxu0 0.0
      %257 = vmatpush2.msra.mxu0 0.0
      %258 = vmatprep.subr.mxu0 0.0
      %259 = vmatpush2.msra.mxu0 0.0
      %260 = vmatprep.subr.mxu0 0.0
      %261 = vmatpush2.msra.mxu0 0.0
      %262 = vmatprep.subr.mxu0 0.0
      %263 = vmatpush2.msra.mxu0 0.0
      %264 = vmatprep.subr.mxu0 0.0
      %265 = vmatpush2.msra.mxu0 0.0
      %266 = vmatprep.mubr.f32.mxu0 0.0
      %267 = vmatmul.mubr.f32.gmra.mxu0 %v197
      %v268 = vpop.f32.mrf.mxu0
      %v269 = vadd.f32 0.0, %v268
      %v270 = vpop.f32.mrf.mxu0
      %271 = vmatprep.mubr.f32.mxu0 0.0
      %272 = vmatmul.mubr.f32.gmra.mxu0 %v200
      %v273 = vpop.f32.mrf.mxu0
      %v274 = vadd.f32 0.0, %v273
      %v275 = vpop.f32.mrf.mxu0
      %276 = vdwg.mxu0
      %277 = vst [vmem:[%s179] sm:$0xff] %v269
      %278 = vst [vmem:[%s179 + $0x8] sm:$0xff] %v274
      %v279 = vadd.f32 %v269, %v274
      %v280 = vrot.slane %v279, 4
      %v281 = vadd.f32 %v279, %v280
      %v282 = vrot.slane %v281, 2
      %v283 = vadd.f32 %v281, %v282
      %v284 = vrot.slane %v283, 1
      %v285 = vadd.f32 %v283, %v284
      %286 = vst [vmem:[%s184] sm:$0x1] %v285
      %v287 = vmul.f32 %v269, %v269
      %v288 = vmul.f32 %v274, %v274
      %v289 = vadd.f32 %v287, %v288
      %v290 = vrot.slane %v289, 4
      %v291 = vadd.f32 %v289, %v290
      %v292 = vrot.slane %v291, 2
      %v293 = vadd.f32 %v291, %v292
      %v294 = vrot.slane %v293, 1
      %v295 = vadd.f32 %v293, %v294
      %296 = vst [vmem:[%s184 + $0x1] sm:$0x1] %v295
      %s297 = smul.u32 2, %s15
      %p298 = scmp.lt.s32.totalorder %s297, 3
      %s299 = scalar_select %p298, %s297, 3
      %s300 = smul.addr %s299, 8
      %s301 = scalar_lea.vmem %s2, %s300
      %p302 = scmp.lt.s32.totalorder %s15, 1
      %s303 = scalar_select %p302, %s15, 1
      %s304 = smul.addr %s303, 2
      %s305 = scalar_lea.vmem %s3, %s304
      // Predicated region
      $region29: #{mobilenet_block.4} parent=27 // pred_check
        %p306 = pneg %p80
      $region30: #{mobilenet_block.4} parent=27 // pred_check_branch
        %308 = sbr.rel (%p306) target = $region32
      $region31: #{mobilenet_block.4} parent=27 // pred_region
        %s309 = smul.u32 2, %s15
      $region32: #{mobilenet_block.4} parent=27 // pred_fallthru
        _
      // Predicated region
      $region33: #{mobilenet_block.4} parent=27 // pred_check
        %p310 = pneg %p106
      $region34: #{mobilenet_block.4} parent=27 // pred_check_branch
        %312 = sbr.rel (%p310) target = $region36
      $region35: #{mobilenet_block.4} parent=27 // pred_region
        _
      $region36: #{mobilenet_block.4} parent=27 // pred_fallthru
        _
    $region28: #{mobilenet_block.4} parent=5 // pred_fallthru
      _
    %p313 = scmp.le.s32.totalorder 2, %s10
    // Predicated region
    $region37: #{mobilenet_block.4} parent=5 // pred_check
      %p314 = pneg %p313
    $region38: #{mobilenet_block.4} parent=5 // pred_check_branch
      %316 = sbr.rel (%p314) target = $region40
    $region39: #{mobilenet_block.4} parent=5 // pred_region
      %s317 = ssub.s32 %s10, 2
      // Predicated region
      $region41: #{mobilenet_block.4} parent=39 // pred_check
        %p318 = pneg %p86
      $region42: #{mobilenet_block.4} parent=39 // pred_check_branch
        %320 = sbr.rel (%p318) target = $region44
      $region43: #{mobilenet_block.4} parent=39 // pred_region
        %s321 = smul.u32 2, %s16
        %p322 = scmp.lt.s32.totalorder %s321, 3
        %s323 = scalar_select %p322, %s321, 3
        %s324 = smul.addr %s323, 8
        %s325 = scalar_lea.vmem %s2, %s324
      $region44: #{mobilenet_block.4} parent=39 // pred_fallthru
        _
      // Predicated region
      $region45: #{mobilenet_block.4} parent=39 // pred_check
        %p326 = pneg %p112
      $region46: #{mobilenet_block.4} parent=39 // pred_check_branch
        %328 = sbr.rel (%p326) target = $region48
      $region47: #{mobilenet_block.4} parent=39 // pred_region
        %p329 = scmp.lt.s32.totalorder %s16, 1
        %s330 = scalar_select %p329, %s16, 1
        %s331 = smul.addr %s330, 2
        %s332 = scalar_lea.vmem %s3, %s331
      $region48: #{mobilenet_block.4} parent=39 // pred_fallthru
        _
    $region40: #{mobilenet_block.4} parent=5 // pred_fallthru
      _
  $region6: #{mobilenet_block.4} parent=0 // loop_footer
    %s14 = sadd.s32 1, %s10
  $region7: #{mobilenet_block.4} parent=0 // loop_footer_branch
    %9 = sbr.rel target = $region3
  $region8: #{mobilenet_block.4} parent=0 // loop_exit
    _

// kernel: mobilenet_block.5
$region0: #{mobilenet_block.5}
  #allocation0 [shape = 'u32[]', space=smem, size = 0x4, offset = 0x4, fixed_abs, tag = 'smem constant byte address 0x4 - core index']
  #allocation1 [shape = 'u32[144,128]{1,0:T(1,128)}', space=vmem, size = 0x12000, scoped, tag = 'internal scratch']
  #allocation2 [shape = 'f32[18,128]{1,0:T(8,128)}', space=vmem, size = 0x3000, scoped, tag = 'scratch operand']
  %s0 = inlined_call_operand.vmem [shape: f32[2,16,128], index: 0, kind: input, shape index: {}]
  %s1 = inlined_call_operand.vmem [shape: f32[1,128], index: 1, kind: input, shape index: {}]
  %s2 = inlined_call_operand.vmem [shape: f32[1,128], index: 2, kind: input, shape index: {}]
  %s3 = inlined_call_operand.vmem [shape: f32[9,128], index: 3, kind: input, shape index: {}]
  %s4 = inlined_call_operand.vmem [shape: f32[2,16,128], index: 4, kind: output, shape index: {0}]
  %s5 = inlined_call_operand.vmem [shape: f32[2,2,128], index: 5, kind: output, shape index: {1}]
  %6 = xla_tuple %s4, %s5
  %s7 = sld [smem:[#allocation0]]
  $region57: #{mobilenet_block.5} parent=0
    _
  %s9 = ssub.s32 1, %s7
  %s10 = scalar_select 0, %s9, %s7
  loop: start=0, step=1, limit=4
  $region2: #{mobilenet_block.5} parent=0 // loop_pre_header
    _
  $region3: #{mobilenet_block.5} parent=0 // loop_header
    %s12 = sphi 0, %s16
    %p13 = scmp.ge.s32.totalorder %s12, 4
    %s22 = sphi 0, %s24
    %s25 = sphi 0, %s22
    %s26 = sphi 0, %s25
    %s42 = sphi 0, %s26
    %s46 = sphi 0, %s46
    %s48 = sphi 0, %s46
    %s49 = sphi 0, %s48
    %s63 = sphi 0, %s49
    %s67 = sphi 0, %s67
    %s69 = sphi 0, %s67
    %s70 = sphi 0, %s69
    %s84 = sphi 0, %s70
    %s88 = sphi 0, %s88
    %s90 = sphi 0, %s88
    %s91 = sphi 0, %s90
    %s105 = sphi 0, %s91
    %s111 = sphi 0, %s113
    %s114 = sphi 0, %s111
    %s115 = sphi 0, %s114
    %s131 = sphi 0, %s115
    %s137 = sphi 0, %s139
    %s140 = sphi 0, %s137
    %s141 = sphi 0, %s140
    %s157 = sphi 0, %s141
  $region4: #{mobilenet_block.5} parent=0 // loop_header_branch
    %15 = sbr.rel (%p13) target = $region8
  $region5: #{mobilenet_block.5} parent=0 // loop_body
    %s17 = ssub.s32 %s12, 1
    %s18 = ssub.s32 %s12, 2
    %s19 = sadd.s32 %s12, 1
    %s20 = ssub.s32 %s12, %s19
    %p21 = scmp.eq.s32.totalorder %s20, 0
    %s23 = sadd.s32 %s22, 1
    %s24 = scalar_select %p21, %s22, %s23
    %p27 = pneg %p21
    %p28 = scmp.eq.s32.totalorder %s12, 1
    %p29 = por %p27, %p28
    %p30 = scmp.ne.s32.totalorder %s22, %s25
    %p31 = scmp.eq.s32.totalorder %s12, 0
    %p32 = por %p30, %p31
    %p33 = scmp.ne.s32.totalorder %s22, %s25
    %p34 = scmp.eq.s32.totalorder %s17, 1
    %p35 = por %p33, %p34
    %p36 = scmp.ne.s32.totalorder %s25, %s26
    %p37 = scmp.eq.s32.totalorder %s17, 0
    %p38 = por %p36, %p37
    %p39 = scmp.ne.s32.totalorder %s25, %s26
    %p40 = scmp.eq.s32.totalorder %s18, 1
    %p41 = por %p39, %p40
    %p43 = scmp.ne.s32.totalorder %s26, %s42
    %p44 = scmp.eq.s32.totalorder %s18, 0
    %p45 = por %p43, %p44
    %s47 = sadd.s32 %s46, 1
    %p50 = scmp.eq.s32.totalorder %s12, 1
    %p51 = scmp.ne.s32.totalorder %s46, %s48
    %p52 = scmp.eq.s32.totalorder %s12, 0
    %p53 = por %p51, %p52
    %p54 = scmp.ne.s32.totalorder %s46, %s48
    %p55 = scmp.eq.s32.totalorder %s17, 1
    %p56 = por %p54, %p55
    %p57 = scmp.ne.s32.totalorder %s48, %s49
    %p58 = scmp.eq.s32.totalorder %s17, 0
    %p59 = por %p57, %p58
    %p60 = scmp.ne.s32.totalorder %s48, %s49
    %p61 = scmp.eq.s32.totalorder %s18, 1
    %p62 = por %p60, %p61
    %p64 = scmp.ne.s32.totalorder %s49, %s63
    %p65 = scmp.eq.s32.totalorder %s18, 0
    %p66 = por %p64, %p65
    %s68 = sadd.s32 %s67, 1
    %p71 = scmp.eq.s32.totalorder %s12, 1
    %p72 = scmp.ne.s32.totalorder %s67, %s69
    %p73 = scmp.eq.s32.totalorder %s12, 0
    %p74 = por %p72, %p73
    %p75 = scmp.ne.s32.totalorder %s67, %s69
    %p76 = scmp.eq.s32.totalorder %s17, 1
    %p77 = por %p75, %p76
    %p78 = scmp.ne.s32.totalorder %s69, %s70
    %p79 = scmp.eq.s32.totalorder %s17, 0
    %p80 = por %p78, %p79
    %p81 = scmp.ne.s32.totalorder %s69, %s70
    %p82 = scmp.eq.s32.totalorder %s18, 1
    %p83 = por %p81, %p82
    %p85 = scmp.ne.s32.totalorder %s70, %s84
    %p86 = scmp.eq.s32.totalorder %s18, 0
    %p87 = por %p85, %p86
    %s89 = sadd.s32 %s88, 1
    %p92 = scmp.eq.s32.totalorder %s12, 1
    %p93 = scmp.ne.s32.totalorder %s88, %s90
    %p94 = scmp.eq.s32.totalorder %s12, 0
    %p95 = por %p93, %p94
    %p96 = scmp.ne.s32.totalorder %s88, %s90
    %p97 = scmp.eq.s32.totalorder %s17, 1
    %p98 = por %p96, %p97
    %p99 = scmp.ne.s32.totalorder %s90, %s91
    %p100 = scmp.eq.s32.totalorder %s17, 0
    %p101 = por %p99, %p100
    %p102 = scmp.ne.s32.totalorder %s90, %s91
    %p103 = scmp.eq.s32.totalorder %s18, 1
    %p104 = por %p102, %p103
    %p106 = scmp.ne.s32.totalorder %s91, %s105
    %p107 = scmp.eq.s32.totalorder %s18, 0
    %p108 = por %p106, %p107
    %s109 = ssub.s32 %s12, %s19
    %p110 = scmp.eq.s32.totalorder %s109, 0
    %s112 = sadd.s32 %s111, 1
    %s113 = scalar_select %p110, %s111, %s112
    %p116 = pneg %p110
    %p117 = scmp.eq.s32.totalorder %s12, 1
    %p118 = por %p116, %p117
    %p119 = scmp.ne.s32.totalorder %s111, %s114
    %p120 = scmp.eq.s32.totalorder %s12, 0
    %p121 = por %p119, %p120
    %p122 = scmp.ne.s32.totalorder %s111, %s114
    %p123 = scmp.eq.s32.totalorder %s17, 1
    %p124 = por %p122, %p123
    %p125 = scmp.ne.s32.totalorder %s114, %s115
    %p126 = scmp.eq.s32.totalorder %s17, 0
    %p127 = por %p125, %p126
    %p128 = scmp.ne.s32.totalorder %s114, %s115
    %p129 = scmp.eq.s32.totalorder %s18, 1
    %p130 = por %p128, %p129
    %p132 = scmp.ne.s32.totalorder %s115, %s131
    %p133 = scmp.eq.s32.totalorder %s18, 0
    %p134 = por %p132, %p133
    %s135 = ssub.s32 %s12, %s19
    %p136 = scmp.eq.s32.totalorder %s135, 0
    %s138 = sadd.s32 %s137, 1
    %s139 = scalar_select %p136, %s137, %s138
    %p142 = pneg %p136
    %p143 = scmp.eq.s32.totalorder %s12, 1
    %p144 = por %p142, %p143
    %p145 = scmp.ne.s32.totalorder %s137, %s140
    %p146 = scmp.eq.s32.totalorder %s12, 0
    %p147 = por %p145, %p146
    %p148 = scmp.ne.s32.totalorder %s137, %s140
    %p149 = scmp.eq.s32.totalorder %s17, 1
    %p150 = por %p148, %p149
    %p151 = scmp.ne.s32.totalorder %s140, %s141
    %p152 = scmp.eq.s32.totalorder %s17, 0
    %p153 = por %p151, %p152
    %p154 = scmp.ne.s32.totalorder %s140, %s141
    %p155 = scmp.eq.s32.totalorder %s18, 1
    %p156 = por %p154, %p155
    %p158 = scmp.ne.s32.totalorder %s141, %s157
    %p159 = scmp.eq.s32.totalorder %s18, 0
    %p160 = por %p158, %p159
    %p161 = scmp.le.s32.totalorder 1, %s12
    %p162 = scmp.lt.s32.totalorder %s12, 3
    %p163 = pnand %p161, %p162
    %p164 = pneg %p163
    // Predicated region
    $region9: #{mobilenet_block.5} parent=5 // pred_check
      _
    $region10: #{mobilenet_block.5} parent=5 // pred_check_branch
      %166 = sbr.rel (%p163) target = $region12
    $region11: #{mobilenet_block.5} parent=5 // pred_region
      %s167 = ssub.s32 %s12, 1
      // Predicated region
      $region13: #{mobilenet_block.5} parent=11 // pred_check
        %p168 = pneg %p59
      $region14: #{mobilenet_block.5} parent=11 // pred_check_branch
        %170 = sbr.rel (%p168) target = $region16
      $region15: #{mobilenet_block.5} parent=11 // pred_region
        _
      $region16: #{mobilenet_block.5} parent=11 // pred_fallthru
        _
      // Predicated region
      $region17: #{mobilenet_block.5} parent=11 // pred_check
        %p171 = pneg %p80
      $region18: #{mobilenet_block.5} parent=11 // pred_check_branch
        %173 = sbr.rel (%p171) target = $region20
      $region19: #{mobilenet_block.5} parent=11 // pred_region
        _
      $region20: #{mobilenet_block.5} parent=11 // pred_fallthru
        _
      // Predicated region
      $region21: #{mobilenet_block.5} parent=11 // pred_check
        %p174 = pneg %p101
      $region22: #{mobilenet_block.5} parent=11 // pred_check_branch
        %176 = sbr.rel (%p174) target = $region24
      $region23: #{mobilenet_block.5} parent=11 // pred_region
        _
      $region24: #{mobilenet_block.5} parent=11 // pred_fallthru
        _
    $region12: #{mobilenet_block.5} parent=5 // pred_fallthru
      _
    %p177 = scmp.lt.s32.totalorder %s12, 2
    // Predicated region
    $region25: #{mobilenet_block.5} parent=5 // pred_check
      %p178 = pneg %p177
    $region26: #{mobilenet_block.5} parent=5 // pred_check_branch
      %180 = sbr.rel (%p178) target = $region28
    $region27: #{mobilenet_block.5} parent=5 // pred_region
      // Predicated region
      $region29: #{mobilenet_block.5} parent=27 // pred_check
        %p181 = pneg %p32
      $region30: #{mobilenet_block.5} parent=27 // pred_check_branch
        %183 = sbr.rel (%p181) target = $region32
      $region31: #{mobilenet_block.5} parent=27 // pred_region
        %p184 = scmp.lt.s32.totalorder %s12, 1
        %s185 = scalar_select %p184, %s12, 1
        %s186 = smul.addr %s185, 2
        %s187 = smul.addr %s186, 8
        %s188 = scalar_lea.vmem %s0, %s187
      $region32: #{mobilenet_block.5} parent=27 // pred_fallthru
        _
    $region28: #{mobilenet_block.5} parent=5 // pred_fallthru
      _
    %p189 = scmp.le.s32.totalorder 1, %s12
    %p190 = scmp.lt.s32.totalorder %s12, 3
    %p191 = pnand %p189, %p190
    %p192 = pneg %p191
    // Predicated region
    $region33: #{mobilenet_block.5} parent=5 // pred_check
      _
    $region34: #{mobilenet_block.5} parent=5 // pred_check_branch
      %194 = sbr.rel (%p191) target = $region36
    $region35: #{mobilenet_block.5} parent=5 // pred_region
      %s195 = ssub.s32 %s12, 1
      %p196 = scmp.lt.s32.totalorder %s17, 1
      %s197 = scalar_select %p196, %s17, 1
      %s198 = smul.addr %s197, 2
      %s199 = smul.addr %s198, 8
      %s200 = scalar_lea.vmem %s0, %s199
      %p201 = pneg %p38
      %p202 = pneg %p35
      %p203 = pneg %p59
      %p204 = pneg %p56
      %p205 = pneg %p80
      %p206 = pneg %p77
      %p207 = pneg %p101
      %p208 = pneg %p98
      %p209 = pneg %p127
      %p210 = pneg %p124
      %p211 = scmp.lt.s32.totalorder %s17, 1
      %s212 = scalar_select %p211, %s17, 1
      %s213 = smul.addr %s212, 2
      %s214 = smul.addr %s213, 8
      %s215 = scalar_lea.vmem %s4, %s214
      %p216 = pneg %p153
      %p217 = pneg %p150
      %p218 = scmp.lt.s32.totalorder %s17, 1
      %s219 = scalar_select %p218, %s17, 1
      %s220 = smul.addr %s219, 2
      %s221 = scalar_lea.vmem %s5, %s220
      %p222 = scmp.lt.s32.totalorder %s17, 1
      %s223 = scalar_select %p222, %s17, 1
      %s224 = smul.addr %s223, 2
      %s225 = smul.addr %s224, 8
      %s226 = scalar_lea.vmem %s0, %s225
      %p227 = scmp.lt.s32.totalorder %s17, 1
      %s228 = scalar_select %p227, %s17, 1
      %s229 = smul.addr %s228, 2
      %s230 = smul.addr %s229, 8
      %s231 = scalar_lea.vmem %s4, %s230
      %p232 = scmp.lt.s32.totalorder %s17, 1
      %s233 = scalar_select %p232, %s17, 1
      %s234 = smul.addr %s233, 2
      %s235 = scalar_lea.vmem %s5, %s234
      %236 = vst [vmem:[#allocation2] sm:$0x1] 0.0
      %237 = vst [vmem:[#allocation2 + $0x11] sm:$0x1] 0.0
      %v238 = vld [vmem:[%s226] sm:$0xff]
      %v239 = vld [vmem:[%s226 + $0x8] sm:$0xff]
      %v240 = vld [vmem:[%s1] sm:$0x1]
      %v242 = vlaneseq
      %v243 = vshrl.u32 %v242, 7
      %v244 = vsub.s32 0, %v243
      %v245 = vrot.slane %v240, %v244
      %v247 = vmul.f32 %v238, %v245
      %v248 = vmul.f32 %v239, %v245
      %v249 = vld [vmem:[%s2] sm:$0x1]
      %v251 = vlaneseq
      %v252 = vshrl.u32 %v251, 7
      %v253 = vsub.s32 0, %v252
      %v254 = vrot.slane %v249, %v253
      %v256 = vadd.f32 %v247, %v254
      %v257 = vadd.f32 %v248, %v254
      %v258 = vmax.f32 %v256, 0.0
      %v259 = vmax.f32 %v257, 0.0
      %v260 = vmin.f32 %v258, 6.0
      %v261 = vmin.f32 %v259, 6.0
      %262 = vst [vmem:[#allocation2 + $0x1] sm:$0xff] %v260
      %263 = vst [vmem:[#allocation2 + $0x9] sm:$0xff] %v261
      %v264 = vlaneseq
      %v265 = vand.u32 %v264, 127
      %v266 = vld [vmem:[#allocation2] sm:$0xff]
      %v267 = vld [vmem:[#allocation2 + $0x8] sm:$0xff]
      %v268 = vld [vmem:[%s3] sm:$0x1]
      %269 = vrot.lane.b32.xlu0 %v266, 8
      %v270 = vpop.permute.xlu0 %269
      %271 = vrot.lane.b32.xlu0 %v267, 8
      %v272 = vpop.permute.xlu0 %271
      %v273 = vadd.s32 %v265, 4294967288
      %vm274 = vcmp.ge.s32.totalorder %v273, 0
      %vm275 = vcmp.lt.s32.totalorder %v273, 128
      %vm276 = vmand %vm274, %vm275
      %v277 = vsel %vm276, %v270, 0.0
      %v278 = vsel %vm276, %v272, 0.0
      %v279 = vlaneseq
      %v280 = vshrl.u32 %v279, 7
      %v281 = vsub.s32 0, %v280
      %v282 = vrot.slane %v268, %v281
      %v283 = vmul.f32 %v277, %v282
      %v284 = vmul.f32 %v278, %v282
      %v285 = vadd.f32 %v283, 0.0
      %v286 = vadd.f32 %v284, 0.0
      %v287 = vld [vmem:[%s3 + $0x1] sm:$0x1]
      %v288 = vlaneseq
      %v289 = vshrl.u32 %v288, 7
      %v290 = vsub.s32 0, %v289
      %v291 = vrot.slane %v287, %v290
      %v292 = vmul.f32 %v266, %v291
      %v293 = vmul.f32 %v267, %v291
      %v294 = vadd.f32 %v285, %v292
      %v295 = vadd.f32 %v286, %v293
      %v296 = vld [vmem:[%s3 + $0x2] sm:$0x1]
      %297 = vrot.lane.b32.xlu0 %v266, 120
      %v298 = vpop.permute.xlu0 %297
      %299 = vrot.lane.b32.xlu0 %v267, 120
      %v300 = vpop.permute.xlu0 %299
      %v301 = vadd.s32 %v265, 8
      %vm302 = vcmp.ge.s32.totalorder %v301, 0
      %vm303 = vcmp.lt.s32.totalorder %v301, 128
      %vm304 = vmand %vm302, %vm303
      %v305 = vsel %vm304, %v298, 0.0
      %v306 = vsel %vm304, %v300, 0.0
      %v307 = vlaneseq
      %v308 = vshrl.u32 %v307, 7
      %v309 = vsub.s32 0, %v308
      %v310 = vrot.slane %v296, %v309
      %v311 = vmul.f32 %v305, %v310
      %v312 = vmul.f32 %v306, %v310
      %v313 = vadd.f32 %v294, %v311
      %v314 = vadd.f32 %v295, %v312
      %v315 = vld [vmem:[#allocation2 + $0x1] sm:$0xff]
      %v316 = vld [vmem:[#allocation2 + $0x9] sm:$0xff]
      %v317 = vld [vmem:[%s3 + $0x3] sm:$0x1]
      %318 = vrot.lane.b32.xlu0 %v315, 8
      %v319 = vpop.permute.xlu0 %318
      %320 = vrot.lane.b32.xlu0 %v316, 8
      %v321 = vpop.permute.xlu0 %320
      %v322 = vsel %vm276, %v319, 0.0
      %v323 = vsel %vm276, %v321, 0.0
      %v324 = vlaneseq
      %v325 = vshrl.u32 %v324, 7
      %v326 = vsub.s32 0, %v325
      %v327 = vrot.slane %v317, %v326
      %v328 = vmul.f32 %v322, %v327
      %v329 = vmul.f32 %v323, %v327
      %v330 = vadd.f32 %v313, %v328
      %v331 = vadd.f32 %v314, %v329
      %v332 = vld [vmem:[%s3 + $0x4] sm:$0x1]
      %v333 = vlaneseq
      %v334 = vshrl.u32 %v333, 7
      %v335 = vsub.s32 0, %v334
      %v336 = vrot.slane %v332, %v335
      %v337 = vmul.f32 %v315, %v336
      %v338 = vmul.f32 %v316, %v336
      %v339 = vadd.f32 %v330, %v337
      %v340 = vadd.f32 %v331, %v338
      %v341 = vld [vmem:[%s3 + $0x5] sm:$0x1]
      %342 = vrot.lane.b32.xlu0 %v315, 120
      %v343 = vpop.permute.xlu0 %342
      %344 = vrot.lane.b32.xlu0 %v316, 120
      %v345 = vpop.permute.xlu0 %344
      %v346 = vsel %vm304, %v343, 0.0
      %v347 = vsel %vm304, %v345, 0.0
      %v348 = vlaneseq
      %v349 = vshrl.u32 %v348, 7
      %v350 = vsub.s32 0, %v349
      %v351 = vrot.slane %v341, %v350
      %v352 = vmul.f32 %v346, %v351
      %v353 = vmul.f32 %v347, %v351
      %v354 = vadd.f32 %v339, %v352
      %v355 = vadd.f32 %v340, %v353
      %v356 = vld [vmem:[#allocation2 + $0x2] sm:$0xff]
      %v357 = vld [vmem:[#allocation2 + $0xa] sm:$0xff]
      %v358 = vld [vmem:[%s3 + $0x6] sm:$0x1]
      %359 = vrot.lane.b32.xlu0 %v356, 8
      %v360 = vpop.permute.xlu0 %359
      %361 = vrot.lane.b32.xlu0 %v357, 8
      %v362 = vpop.permute.xlu0 %361
      %v363 = vsel %vm276, %v360, 0.0
      %v364 = vsel %vm276, %v362, 0.0
      %v365 = vlaneseq
      %v366 = vshrl.u32 %v365, 7
      %v367 = vsub.s32 0, %v366
      %v368 = vrot.slane %v358, %v367
      %v369 = vmul.f32 %v363, %v368
      %v370 = vmul.f32 %v364, %v368
      %v371 = vadd.f32 %v354, %v369
      %v372 = vadd.f32 %v355, %v370
      %v373 = vld [vmem:[%s3 + $0x7] sm:$0x1]
      %v374 = vlaneseq
      %v375 = vshrl.u32 %v374, 7
      %v376 = vsub.s32 0, %v375
      %v377 = vrot.slane %v373, %v376
      %v378 = vmul.f32 %v356, %v377
      %v379 = vmul.f32 %v357, %v377
      %v380 = vadd.f32 %v371, %v378
      %v381 = vadd.f32 %v372, %v379
      %v382 = vld [vmem:[%s3 + $0x8] sm:$0x1]
      %383 = vrot.lane.b32.xlu0 %v356, 120
      %v384 = vpop.permute.xlu0 %383
      %385 = vrot.lane.b32.xlu0 %v357, 120
      %v386 = vpop.permute.xlu0 %385
      %v387 = vsel %vm304, %v384, 0.0
      %v388 = vsel %vm304, %v386, 0.0
      %v389 = vlaneseq
      %v390 = vshrl.u32 %v389, 7
      %v391 = vsub.s32 0, %v390
      %v392 = vrot.slane %v382, %v391
      %v393 = vmul.f32 %v387, %v392
      %v394 = vmul.f32 %v388, %v392
      %v395 = vadd.f32 %v380, %v393
      %v396 = vadd.f32 %v381, %v394
      %397 = vst [vmem:[%s231] sm:$0xff] %v395
      %398 = vst [vmem:[%s231 + $0x8] sm:$0xff] %v396
      %v399 = vadd.f32 %v395, %v396
      %v400 = vrot.slane %v399, 4
      %v401 = vadd.f32 %v399, %v400
      %v402 = vrot.slane %v401, 2
      %v403 = vadd.f32 %v401, %v402
      %v404 = vrot.slane %v403, 1
      %v405 = vadd.f32 %v403, %v404
      %406 = vst [vmem:[%s235] sm:$0x1] %v405
      %v407 = vmul.f32 %v395, %v395
      %v408 = vmul.f32 %v396, %v396
      %v409 = vadd.f32 %v407, %v408
      %v410 = vrot.slane %v409, 4
      %v411 = vadd.f32 %v409, %v410
      %v412 = vrot.slane %v411, 2
      %v413 = vadd.f32 %v411, %v412
      %v414 = vrot.slane %v413, 1
      %v415 = vadd.f32 %v413, %v414
      %416 = vst [vmem:[%s235 + $0x1] sm:$0x1] %v415
      %p417 = scmp.lt.s32.totalorder %s17, 1
      %s418 = scalar_select %p417, %s17, 1
      %s419 = smul.addr %s418, 2
      %s420 = smul.addr %s419, 8
      %s421 = scalar_lea.vmem %s4, %s420
      %p422 = scmp.lt.s32.totalorder %s17, 1
      %s423 = scalar_select %p422, %s17, 1
      %s424 = smul.addr %s423, 2
      %s425 = scalar_lea.vmem %s5, %s424
      // Predicated region
      $region37: #{mobilenet_block.5} parent=35 // pred_check
        %p426 = pneg %p124
      $region38: #{mobilenet_block.5} parent=35 // pred_check_branch
        %428 = sbr.rel (%p426) target = $region40
      $region39: #{mobilenet_block.5} parent=35 // pred_region
        _
      $region40: #{mobilenet_block.5} parent=35 // pred_fallthru
        _
      // Predicated region
      $region41: #{mobilenet_block.5} parent=35 // pred_check
        %p429 = pneg %p150
      $region42: #{mobilenet_block.5} parent=35 // pred_check_branch
        %431 = sbr.rel (%p429) target = $region44
      $region43: #{mobilenet_block.5} parent=35 // pred_region
        _
      $region44: #{mobilenet_block.5} parent=35 // pred_fallthru
        _
    $region36: #{mobilenet_block.5} parent=5 // pred_fallthru
      _
    %p432 = scmp.le.s32.totalorder 2, %s12
    // Predicated region
    $region45: #{mobilenet_block.5} parent=5 // pred_check
      %p433 = pneg %p432
    $region46: #{mobilenet_block.5} parent=5 // pred_check_branch
      %435 = sbr.rel (%p433) target = $region48
    $region47: #{mobilenet_block.5} parent=5 // pred_region
      %s436 = ssub.s32 %s12, 2
      // Predicated region
      $region49: #{mobilenet_block.5} parent=47 // pred_check
        %p437 = pneg %p130
      $region50: #{mobilenet_block.5} parent=47 // pred_check_branch
        %439 = sbr.rel (%p437) target = $region52
      $region51: #{mobilenet_block.5} parent=47 // pred_region
        %p440 = scmp.lt.s32.totalorder %s18, 1
        %s441 = scalar_select %p440, %s18, 1
        %s442 = smul.addr %s441, 2
        %s443 = smul.addr %s442, 8
        %s444 = scalar_lea.vmem %s4, %s443
      $region52: #{mobilenet_block.5} parent=47 // pred_fallthru
        _
      // Predicated region
      $region53: #{mobilenet_block.5} parent=47 // pred_check
        %p445 = pneg %p156
      $region54: #{mobilenet_block.5} parent=47 // pred_check_branch
        %447 = sbr.rel (%p445) target = $region56
      $region55: #{mobilenet_block.5} parent=47 // pred_region
        %p448 = scmp.lt.s32.totalorder %s18, 1
        %s449 = scalar_select %p448, %s18, 1
        %s450 = smul.addr %s449, 2
        %s451 = scalar_lea.vmem %s5, %s450
      $region56: #{mobilenet_block.5} parent=47 // pred_fallthru
        _
    $region48: #{mobilenet_block.5} parent=5 // pred_fallthru
      _
  $region6: #{mobilenet_block.5} parent=0 // loop_footer
    %s16 = sadd.s32 1, %s12
  $region7: #{mobilenet_block.5} parent=0 // loop_footer_branch
    %11 = sbr.rel target = $region3
  $region8: #{mobilenet_block.5} parent=0 // loop_exit
    _

// kernel: mobilenet_block.6
$region0: #{mobilenet_block.6}
  #allocation0 [shape = 'u32[]', space=smem, size = 0x4, offset = 0x4, fixed_abs, tag = 'smem constant byte address 0x4 - core index']
  #allocation1 [shape = 'u32[144,128]{1,0:T(1,128)}', space=vmem, size = 0x12000, scoped, tag = 'internal scratch']
  %s0 = inlined_call_operand.vmem [shape: f32[32,128], index: 0, kind: input, shape index: {}]
  %s1 = inlined_call_operand.vmem [shape: f32[1,128], index: 1, kind: input, shape index: {}]
  %s2 = inlined_call_operand.vmem [shape: f32[1,128], index: 2, kind: input, shape index: {}]
  %s3 = inlined_call_operand.vmem [shape: f32[128,128], index: 3, kind: input, shape index: {}]
  %s4 = inlined_call_operand.vmem [shape: f32[32,128], index: 4, kind: output, shape index: {0}]
  %s5 = inlined_call_operand.vmem [shape: f32[2,2,128], index: 5, kind: output, shape index: {1}]
  %6 = xla_tuple %s4, %s5
  %s7 = sld [smem:[#allocation0]]
  $region57: #{mobilenet_block.6} parent=0
    _
  %s9 = ssub.s32 1, %s7
  %s10 = scalar_select 0, %s9, %s7
  loop: start=0, step=1, limit=4
  $region2: #{mobilenet_block.6} parent=0 // loop_pre_header
    _
  $region3: #{mobilenet_block.6} parent=0 // loop_header
    %s12 = sphi 0, %s16
    %p13 = scmp.ge.s32.totalorder %s12, 4
    %s22 = sphi 0, %s24
    %s25 = sphi 0, %s22
    %s26 = sphi 0, %s25
    %s42 = sphi 0, %s26
    %s46 = sphi 0, %s46
    %s48 = sphi 0, %s46
    %s49 = sphi 0, %s48
    %s63 = sphi 0, %s49
    %s67 = sphi 0, %s67
    %s69 = sphi 0, %s67
    %s70 = sphi 0, %s69
    %s84 = sphi 0, %s70
    %s88 = sphi 0, %s88
    %s90 = sphi 0, %s88
    %s91 = sphi 0, %s90
    %s105 = sphi 0, %s91
    %s111 = sphi 0, %s113
    %s114 = sphi 0, %s111
    %s115 = sphi 0, %s114
    %s131 = sphi 0, %s115
    %s137 = sphi 0, %s139
    %s140 = sphi 0, %s137
    %s141 = sphi 0, %s140
    %s157 = sphi 0, %s141
  $region4: #{mobilenet_block.6} parent=0 // loop_header_branch
    %15 = sbr.rel (%p13) target = $region8
  $region5: #{mobilenet_block.6} parent=0 // loop_body
    %s17 = ssub.s32 %s12, 1
    %s18 = ssub.s32 %s12, 2
    %s19 = sadd.s32 %s12, 1
    %s20 = ssub.s32 %s12, %s19
    %p21 = scmp.eq.s32.totalorder %s20, 0
    %s23 = sadd.s32 %s22, 1
    %s24 = scalar_select %p21, %s22, %s23
    %p27 = pneg %p21
    %p28 = scmp.eq.s32.totalorder %s12, 1
    %p29 = por %p27, %p28
    %p30 = scmp.ne.s32.totalorder %s22, %s25
    %p31 = scmp.eq.s32.totalorder %s12, 0
    %p32 = por %p30, %p31
    %p33 = scmp.ne.s32.totalorder %s22, %s25
    %p34 = scmp.eq.s32.totalorder %s17, 1
    %p35 = por %p33, %p34
    %p36 = scmp.ne.s32.totalorder %s25, %s26
    %p37 = scmp.eq.s32.totalorder %s17, 0
    %p38 = por %p36, %p37
    %p39 = scmp.ne.s32.totalorder %s25, %s26
    %p40 = scmp.eq.s32.totalorder %s18, 1
    %p41 = por %p39, %p40
    %p43 = scmp.ne.s32.totalorder %s26, %s42
    %p44 = scmp.eq.s32.totalorder %s18, 0
    %p45 = por %p43, %p44
    %s47 = sadd.s32 %s46, 1
    %p50 = scmp.eq.s32.totalorder %s12, 1
    %p51 = scmp.ne.s32.totalorder %s46, %s48
    %p52 = scmp.eq.s32.totalorder %s12, 0
    %p53 = por %p51, %p52
    %p54 = scmp.ne.s32.totalorder %s46, %s48
    %p55 = scmp.eq.s32.totalorder %s17, 1
    %p56 = por %p54, %p55
    %p57 = scmp.ne.s32.totalorder %s48, %s49
    %p58 = scmp.eq.s32.totalorder %s17, 0
    %p59 = por %p57, %p58
    %p60 = scmp.ne.s32.totalorder %s48, %s49
    %p61 = scmp.eq.s32.totalorder %s18, 1
    %p62 = por %p60, %p61
    %p64 = scmp.ne.s32.totalorder %s49, %s63
    %p65 = scmp.eq.s32.totalorder %s18, 0
    %p66 = por %p64, %p65
    %s68 = sadd.s32 %s67, 1
    %p71 = scmp.eq.s32.totalorder %s12, 1
    %p72 = scmp.ne.s32.totalorder %s67, %s69
    %p73 = scmp.eq.s32.totalorder %s12, 0
    %p74 = por %p72, %p73
    %p75 = scmp.ne.s32.totalorder %s67, %s69
    %p76 = scmp.eq.s32.totalorder %s17, 1
    %p77 = por %p75, %p76
    %p78 = scmp.ne.s32.totalorder %s69, %s70
    %p79 = scmp.eq.s32.totalorder %s17, 0
    %p80 = por %p78, %p79
    %p81 = scmp.ne.s32.totalorder %s69, %s70
    %p82 = scmp.eq.s32.totalorder %s18, 1
    %p83 = por %p81, %p82
    %p85 = scmp.ne.s32.totalorder %s70, %s84
    %p86 = scmp.eq.s32.totalorder %s18, 0
    %p87 = por %p85, %p86
    %s89 = sadd.s32 %s88, 1
    %p92 = scmp.eq.s32.totalorder %s12, 1
    %p93 = scmp.ne.s32.totalorder %s88, %s90
    %p94 = scmp.eq.s32.totalorder %s12, 0
    %p95 = por %p93, %p94
    %p96 = scmp.ne.s32.totalorder %s88, %s90
    %p97 = scmp.eq.s32.totalorder %s17, 1
    %p98 = por %p96, %p97
    %p99 = scmp.ne.s32.totalorder %s90, %s91
    %p100 = scmp.eq.s32.totalorder %s17, 0
    %p101 = por %p99, %p100
    %p102 = scmp.ne.s32.totalorder %s90, %s91
    %p103 = scmp.eq.s32.totalorder %s18, 1
    %p104 = por %p102, %p103
    %p106 = scmp.ne.s32.totalorder %s91, %s105
    %p107 = scmp.eq.s32.totalorder %s18, 0
    %p108 = por %p106, %p107
    %s109 = ssub.s32 %s12, %s19
    %p110 = scmp.eq.s32.totalorder %s109, 0
    %s112 = sadd.s32 %s111, 1
    %s113 = scalar_select %p110, %s111, %s112
    %p116 = pneg %p110
    %p117 = scmp.eq.s32.totalorder %s12, 1
    %p118 = por %p116, %p117
    %p119 = scmp.ne.s32.totalorder %s111, %s114
    %p120 = scmp.eq.s32.totalorder %s12, 0
    %p121 = por %p119, %p120
    %p122 = scmp.ne.s32.totalorder %s111, %s114
    %p123 = scmp.eq.s32.totalorder %s17, 1
    %p124 = por %p122, %p123
    %p125 = scmp.ne.s32.totalorder %s114, %s115
    %p126 = scmp.eq.s32.totalorder %s17, 0
    %p127 = por %p125, %p126
    %p128 = scmp.ne.s32.totalorder %s114, %s115
    %p129 = scmp.eq.s32.totalorder %s18, 1
    %p130 = por %p128, %p129
    %p132 = scmp.ne.s32.totalorder %s115, %s131
    %p133 = scmp.eq.s32.totalorder %s18, 0
    %p134 = por %p132, %p133
    %s135 = ssub.s32 %s12, %s19
    %p136 = scmp.eq.s32.totalorder %s135, 0
    %s138 = sadd.s32 %s137, 1
    %s139 = scalar_select %p136, %s137, %s138
    %p142 = pneg %p136
    %p143 = scmp.eq.s32.totalorder %s12, 1
    %p144 = por %p142, %p143
    %p145 = scmp.ne.s32.totalorder %s137, %s140
    %p146 = scmp.eq.s32.totalorder %s12, 0
    %p147 = por %p145, %p146
    %p148 = scmp.ne.s32.totalorder %s137, %s140
    %p149 = scmp.eq.s32.totalorder %s17, 1
    %p150 = por %p148, %p149
    %p151 = scmp.ne.s32.totalorder %s140, %s141
    %p152 = scmp.eq.s32.totalorder %s17, 0
    %p153 = por %p151, %p152
    %p154 = scmp.ne.s32.totalorder %s140, %s141
    %p155 = scmp.eq.s32.totalorder %s18, 1
    %p156 = por %p154, %p155
    %p158 = scmp.ne.s32.totalorder %s141, %s157
    %p159 = scmp.eq.s32.totalorder %s18, 0
    %p160 = por %p158, %p159
    %p161 = scmp.le.s32.totalorder 1, %s12
    %p162 = scmp.lt.s32.totalorder %s12, 3
    %p163 = pnand %p161, %p162
    %p164 = pneg %p163
    // Predicated region
    $region9: #{mobilenet_block.6} parent=5 // pred_check
      _
    $region10: #{mobilenet_block.6} parent=5 // pred_check_branch
      %166 = sbr.rel (%p163) target = $region12
    $region11: #{mobilenet_block.6} parent=5 // pred_region
      %s167 = ssub.s32 %s12, 1
      // Predicated region
      $region13: #{mobilenet_block.6} parent=11 // pred_check
        %p168 = pneg %p59
      $region14: #{mobilenet_block.6} parent=11 // pred_check_branch
        %170 = sbr.rel (%p168) target = $region16
      $region15: #{mobilenet_block.6} parent=11 // pred_region
        _
      $region16: #{mobilenet_block.6} parent=11 // pred_fallthru
        _
      // Predicated region
      $region17: #{mobilenet_block.6} parent=11 // pred_check
        %p171 = pneg %p80
      $region18: #{mobilenet_block.6} parent=11 // pred_check_branch
        %173 = sbr.rel (%p171) target = $region20
      $region19: #{mobilenet_block.6} parent=11 // pred_region
        _
      $region20: #{mobilenet_block.6} parent=11 // pred_fallthru
        _
      // Predicated region
      $region21: #{mobilenet_block.6} parent=11 // pred_check
        %p174 = pneg %p101
      $region22: #{mobilenet_block.6} parent=11 // pred_check_branch
        %176 = sbr.rel (%p174) target = $region24
      $region23: #{mobilenet_block.6} parent=11 // pred_region
        _
      $region24: #{mobilenet_block.6} parent=11 // pred_fallthru
        _
    $region12: #{mobilenet_block.6} parent=5 // pred_fallthru
      _
    %p177 = scmp.lt.s32.totalorder %s12, 2
    // Predicated region
    $region25: #{mobilenet_block.6} parent=5 // pred_check
      %p178 = pneg %p177
    $region26: #{mobilenet_block.6} parent=5 // pred_check_branch
      %180 = sbr.rel (%p178) target = $region28
    $region27: #{mobilenet_block.6} parent=5 // pred_region
      // Predicated region
      $region29: #{mobilenet_block.6} parent=27 // pred_check
        %p181 = pneg %p32
      $region30: #{mobilenet_block.6} parent=27 // pred_check_branch
        %183 = sbr.rel (%p181) target = $region32
      $region31: #{mobilenet_block.6} parent=27 // pred_region
        %s184 = smul.u32 2, %s12
        %p185 = scmp.lt.s32.totalorder %s184, 3
        %s186 = scalar_select %p185, %s184, 3
        %s187 = smul.addr %s186, 8
        %s188 = scalar_lea.vmem %s0, %s187
        %s189 = smul.u32 2, %s12
      $region32: #{mobilenet_block.6} parent=27 // pred_fallthru
        _
    $region28: #{mobilenet_block.6} parent=5 // pred_fallthru
      _
    %p190 = scmp.le.s32.totalorder 1, %s12
    %p191 = scmp.lt.s32.totalorder %s12, 3
    %p192 = pnand %p190, %p191
    %p193 = pneg %p192
    // Predicated region
    $region33: #{mobilenet_block.6} parent=5 // pred_check
      _
    $region34: #{mobilenet_block.6} parent=5 // pred_check_branch
      %195 = sbr.rel (%p192) target = $region36
    $region35: #{mobilenet_block.6} parent=5 // pred_region
      %s196 = ssub.s32 %s12, 1
      %s197 = smul.u32 2, %s17
      %p198 = scmp.lt.s32.totalorder %s197, 3
      %s199 = scalar_select %p198, %s197, 3
      %s200 = smul.addr %s199, 8
      %s201 = scalar_lea.vmem %s0, %s200
      %p202 = pneg %p38
      %p203 = pneg %p35
      %p204 = pneg %p59
      %p205 = pneg %p56
      %p206 = pneg %p80
      %p207 = pneg %p77
      %p208 = pneg %p101
      %p209 = pneg %p98
      %p210 = pneg %p127
      %p211 = pneg %p124
      %s212 = smul.u32 2, %s17
      %p213 = scmp.lt.s32.totalorder %s212, 3
      %s214 = scalar_select %p213, %s212, 3
      %s215 = smul.addr %s214, 8
      %s216 = scalar_lea.vmem %s4, %s215
      %p217 = pneg %p153
      %p218 = pneg %p150
      %p219 = scmp.lt.s32.totalorder %s17, 1
      %s220 = scalar_select %p219, %s17, 1
      %s221 = smul.addr %s220, 2
      %s222 = scalar_lea.vmem %s5, %s221
      %s223 = smul.u32 2, %s17
      %p224 = scmp.lt.s32.totalorder %s223, 3
      %s225 = scalar_select %p224, %s223, 3
      %s226 = smul.addr %s225, 8
      %s227 = scalar_lea.vmem %s0, %s226
      %s228 = smul.u32 2, %s17
      %s229 = smul.u32 2, %s17
      %p230 = scmp.lt.s32.totalorder %s229, 3
      %s231 = scalar_select %p230, %s229, 3
      %s232 = smul.addr %s231, 8
      %s233 = scalar_lea.vmem %s4, %s232
      %s234 = smul.u32 2, %s17
      %p235 = scmp.lt.s32.totalorder %s17, 1
      %s236 = scalar_select %p235, %s17, 1
      %s237 = smul.addr %s236, 2
      %s238 = scalar_lea.vmem %s5, %s237
      %v239 = vld [vmem:[%s227] sm:$0xff]
      %v240 = vld [vmem:[%s227 + $0x8] sm:$0xff]
      %v241 = vld [vmem:[%s1] sm:$0x1]
      %v243 = vlaneseq
      %v244 = vshrl.u32 %v243, 7
      %v245 = vsub.s32 0, %v244
      %v246 = vrot.slane %v241, %v245
      %v248 = vmul.f32 %v239, %v246
      %v249 = vmul.f32 %v240, %v246
      %v250 = vld [vmem:[%s2] sm:$0x1]
      %v252 = vlaneseq
      %v253 = vshrl.u32 %v252, 7
      %v254 = vsub.s32 0, %v253
      %v255 = vrot.slane %v250, %v254
      %v257 = vadd.f32 %v248, %v255
      %v258 = vadd.f32 %v249, %v255
      %v259 = vmax.f32 %v257, 0.0
      %v260 = vmax.f32 %v258, 0.0
      %v261 = vmin.f32 %v259, 6.0
      %v262 = vmin.f32 %v260, 6.0
      %v263 = vld [vmem:[%s3] sm:$0xff]
      %v264 = vld [vmem:[%s3 + $0x8] sm:$0xff]
      %v265 = vld [vmem:[%s3 + $0x10] sm:$0xff]
      %v266 = vld [vmem:[%s3 + $0x18] sm:$0xff]
      %v267 = vld [vmem:[%s3 + $0x20] sm:$0xff]
      %v268 = vld [vmem:[%s3 + $0x28] sm:$0xff]
      %v269 = vld [vmem:[%s3 + $0x30] sm:$0xff]
      %v270 = vld [vmem:[%s3 + $0x38] sm:$0xff]
      %v271 = vld [vmem:[%s3 + $0x40] sm:$0xff]
      %v272 = vld [vmem:[%s3 + $0x48] sm:$0xff]
      %v273 = vld [vmem:[%s3 + $0x50] sm:$0xff]
      %v274 = vld [vmem:[%s3 + $0x58] sm:$0xff]
      %v275 = vld [vmem:[%s3 + $0x60] sm:$0xff]
      %v276 = vld [vmem:[%s3 + $0x68] sm:$0xff]
      %v277 = vld [vmem:[%s3 + $0x70] sm:$0xff]
      %v278 = vld [vmem:[%s3 + $0x78] sm:$0xff]
      %279 = vmatprep.subr.mxu0 0.0
      %280 = vmatpush1.msra.mxu0 %v278
      %281 = vmatprep.subr.mxu0 0.0
      %282 = vmatpush1.msra.mxu0 %v277
      %283 = vmatprep.subr.mxu0 0.0
      %284 = vmatpush1.msra.mxu0 %v276
      %285 = vmatprep.subr.mxu0 0.0
      %286 = vmatpush1.msra.mxu0 %v275
      %287 = vmatprep.subr.mxu0 0.0
      %288 = vmatpush1.msra.mxu0 %v274
      %289 = vmatprep.subr.mxu0 0.0
      %290 = vmatpush1.msra.mxu0 %v273
      %291 = vmatprep.subr.mxu0 0.0
      %292 = vmatpush1.msra.mxu0 %v272
      %293 = vmatprep.subr.mxu0 0.0
      %294 = vmatpush1.msra.mxu0 %v271
      %295 = vmatprep.subr.mxu0 0.0
      %296 = vmatpush1.msra.mxu0 %v270
      %297 = vmatprep.subr.mxu0 0.0
      %298 = vmatpush1.msra.mxu0 %v269
      %299 = vmatprep.subr.mxu0 0.0
      %300 = vmatpush1.msra.mxu0 %v268
      %301 = vmatprep.subr.mxu0 0.0
      %302 = vmatpush1.msra.mxu0 %v267
      %303 = vmatprep.subr.mxu0 0.0
      %304 = vmatpush1.msra.mxu0 %v266
      %305 = vmatprep.subr.mxu0 0.0
      %306 = vmatpush1.msra.mxu0 %v265
      %307 = vmatprep.subr.mxu0 0.0
      %308 = vmatpush1.msra.mxu0 %v264
      %309 = vmatprep.subr.mxu0 0.0
      %310 = vmatpush1.msra.mxu0 %v263
      %311 = vmatprep.subr.mxu0 0.0
      %312 = vmatpush2.msra.mxu0 0.0
      %313 = vmatprep.subr.mxu0 0.0
      %314 = vmatpush2.msra.mxu0 0.0
      %315 = vmatprep.subr.mxu0 0.0
      %316 = vmatpush2.msra.mxu0 0.0
      %317 = vmatprep.subr.mxu0 0.0
      %318 = vmatpush2.msra.mxu0 0.0
      %319 = vmatprep.subr.mxu0 0.0
      %320 = vmatpush2.msra.mxu0 0.0
      %321 = vmatprep.subr.mxu0 0.0
      %322 = vmatpush2.msra.mxu0 0.0
      %323 = vmatprep.subr.mxu0 0.0
      %324 = vmatpush2.msra.mxu0 0.0
      %325 = vmatprep.subr.mxu0 0.0
      %326 = vmatpush2.msra.mxu0 0.0
      %327 = vmatprep.subr.mxu0 0.0
      %328 = vmatpush2.msra.mxu0 0.0
      %329 = vmatprep.subr.mxu0 0.0
      %330 = vmatpush2.msra.mxu0 0.0
      %331 = vmatprep.subr.mxu0 0.0
      %332 = vmatpush2.msra.mxu0 0.0
      %333 = vmatprep.subr.mxu0 0.0
      %334 = vmatpush2.msra.mxu0 0.0
      %335 = vmatprep.subr.mxu0 0.0
      %336 = vmatpush2.msra.mxu0 0.0
      %337 = vmatprep.subr.mxu0 0.0
      %338 = vmatpush2.msra.mxu0 0.0
      %339 = vmatprep.subr.mxu0 0.0
      %340 = vmatpush2.msra.mxu0 0.0
      %341 = vmatprep.subr.mxu0 0.0
      %342 = vmatpush2.msra.mxu0 0.0
      %343 = vmatprep.mubr.f32.mxu0 0.0
      %344 = vmatmul.mubr.f32.gmra.mxu0 %v261
      %v345 = vpop.f32.mrf.mxu0
      %v346 = vadd.f32 0.0, %v345
      %v347 = vpop.f32.mrf.mxu0
      %348 = vmatprep.mubr.f32.mxu0 0.0
      %349 = vmatmul.mubr.f32.gmra.mxu0 %v262
      %v350 = vpop.f32.mrf.mxu0
      %v351 = vadd.f32 0.0, %v350
      %v352 = vpop.f32.mrf.mxu0
      %353 = vdwg.mxu0
      %354 = vst [vmem:[%s233] sm:$0xff] %v346
      %355 = vst [vmem:[%s233 + $0x8] sm:$0xff] %v351
      %v356 = vadd.f32 %v346, %v351
      %v357 = vrot.slane %v356, 4
      %v358 = vadd.f32 %v356, %v357
      %v359 = vrot.slane %v358, 2
      %v360 = vadd.f32 %v358, %v359
      %v361 = vrot.slane %v360, 1
      %v362 = vadd.f32 %v360, %v361
      %363 = vst [vmem:[%s238] sm:$0x1] %v362
      %v364 = vmul.f32 %v346, %v346
      %v365 = vmul.f32 %v351, %v351
      %v366 = vadd.f32 %v364, %v365
      %v367 = vrot.slane %v366, 4
      %v368 = vadd.f32 %v366, %v367
      %v369 = vrot.slane %v368, 2
      %v370 = vadd.f32 %v368, %v369
      %v371 = vrot.slane %v370, 1
      %v372 = vadd.f32 %v370, %v371
      %373 = vst [vmem:[%s238 + $0x1] sm:$0x1] %v372
      %s374 = smul.u32 2, %s17
      %p375 = scmp.lt.s32.totalorder %s374, 3
      %s376 = scalar_select %p375, %s374, 3
      %s377 = smul.addr %s376, 8
      %s378 = scalar_lea.vmem %s4, %s377
      %p379 = scmp.lt.s32.totalorder %s17, 1
      %s380 = scalar_select %p379, %s17, 1
      %s381 = smul.addr %s380, 2
      %s382 = scalar_lea.vmem %s5, %s381
      // Predicated region
      $region37: #{mobilenet_block.6} parent=35 // pred_check
        %p383 = pneg %p124
      $region38: #{mobilenet_block.6} parent=35 // pred_check_branch
        %385 = sbr.rel (%p383) target = $region40
      $region39: #{mobilenet_block.6} parent=35 // pred_region
        %s386 = smul.u32 2, %s17
      $region40: #{mobilenet_block.6} parent=35 // pred_fallthru
        _
      // Predicated region
      $region41: #{mobilenet_block.6} parent=35 // pred_check
        %p387 = pneg %p150
      $region42: #{mobilenet_block.6} parent=35 // pred_check_branch
        %389 = sbr.rel (%p387) target = $region44
      $region43: #{mobilenet_block.6} parent=35 // pred_region
        _
      $region44: #{mobilenet_block.6} parent=35 // pred_fallthru
        _
    $region36: #{mobilenet_block.6} parent=5 // pred_fallthru
      _
    %p390 = scmp.le.s32.totalorder 2, %s12
    // Predicated region
    $region45: #{mobilenet_block.6} parent=5 // pred_check
      %p391 = pneg %p390
    $region46: #{mobilenet_block.6} parent=5 // pred_check_branch
      %393 = sbr.rel (%p391) target = $region48
    $region47: #{mobilenet_block.6} parent=5 // pred_region
      %s394 = ssub.s32 %s12, 2
      // Predicated region
      $region49: #{mobilenet_block.6} parent=47 // pred_check
        %p395 = pneg %p130
      $region50: #{mobilenet_block.6} parent=47 // pred_check_branch
        %397 = sbr.rel (%p395) target = $region52
      $region51: #{mobilenet_block.6} parent=47 // pred_region
        %s398 = smul.u32 2, %s18
        %p399 = scmp.lt.s32.totalorder %s398, 3
        %s400 = scalar_select %p399, %s398, 3
        %s401 = smul.addr %s400, 8
        %s402 = scalar_lea.vmem %s4, %s401
      $region52: #{mobilenet_block.6} parent=47 // pred_fallthru
        _
      // Predicated region
      $region53: #{mobilenet_block.6} parent=47 // pred_check
        %p403 = pneg %p156
      $region54: #{mobilenet_block.6} parent=47 // pred_check_branch
        %405 = sbr.rel (%p403) target = $region56
      $region55: #{mobilenet_block.6} parent=47 // pred_region
        %p406 = scmp.lt.s32.totalorder %s18, 1
        %s407 = scalar_select %p406, %s18, 1
        %s408 = smul.addr %s407, 2
        %s409 = scalar_lea.vmem %s5, %s408
      $region56: #{mobilenet_block.6} parent=47 // pred_fallthru
        _
    $region48: #{mobilenet_block.6} parent=5 // pred_fallthru
      _
  $region6: #{mobilenet_block.6} parent=0 // loop_footer
    %s16 = sadd.s32 1, %s12
  $region7: #{mobilenet_block.6} parent=0 // loop_footer_branch
    %11 = sbr.rel target = $region3
  $region8: #{mobilenet_block.6} parent=0 // loop_exit
    _

// kernel: mobilenet_block.7
$region0: #{mobilenet_block.7}
  #allocation0 [shape = 'u32[]', space=smem, size = 0x4, offset = 0x4, fixed_abs, tag = 'smem constant byte address 0x4 - core index']
  #allocation1 [shape = 'u32[144,128]{1,0:T(1,128)}', space=vmem, size = 0x12000, scoped, tag = 'internal scratch']
  %s0 = inlined_call_operand.vmem [shape: f32[32,128], index: 0, kind: input, shape index: {}]
  %s1 = inlined_call_operand.vmem [shape: f32[1,128], index: 1, kind: input, shape index: {}]
  %s2 = inlined_call_operand.vmem [shape: f32[1,128], index: 2, kind: input, shape index: {}]
  %s3 = inlined_call_operand.vmem [shape: f32[32,128], index: 3, kind: output, shape index: {}]
  %s4 = sld [smem:[#allocation0]]
  $region45: #{mobilenet_block.7} parent=0
    _
  %s6 = ssub.s32 1, %s4
  %s7 = scalar_select 0, %s6, %s4
  loop: start=0, step=1, limit=4
  $region2: #{mobilenet_block.7} parent=0 // loop_pre_header
    _
  $region3: #{mobilenet_block.7} parent=0 // loop_header
    %s9 = sphi 0, %s13
    %p10 = scmp.ge.s32.totalorder %s9, 4
    %s19 = sphi 0, %s21
    %s22 = sphi 0, %s19
    %s23 = sphi 0, %s22
    %s39 = sphi 0, %s23
    %s43 = sphi 0, %s43
    %s45 = sphi 0, %s43
    %s46 = sphi 0, %s45
    %s60 = sphi 0, %s46
    %s64 = sphi 0, %s64
    %s66 = sphi 0, %s64
    %s67 = sphi 0, %s66
    %s81 = sphi 0, %s67
    %s87 = sphi 0, %s89
    %s90 = sphi 0, %s87
    %s91 = sphi 0, %s90
    %s107 = sphi 0, %s91
  $region4: #{mobilenet_block.7} parent=0 // loop_header_branch
    %12 = sbr.rel (%p10) target = $region8
  $region5: #{mobilenet_block.7} parent=0 // loop_body
    %s14 = ssub.s32 %s9, 1
    %s15 = ssub.s32 %s9, 2
    %s16 = sadd.s32 %s9, 1
    %s17 = ssub.s32 %s9, %s16
    %p18 = scmp.eq.s32.totalorder %s17, 0
    %s20 = sadd.s32 %s19, 1
    %s21 = scalar_select %p18, %s19, %s20
    %p24 = pneg %p18
    %p25 = scmp.eq.s32.totalorder %s9, 1
    %p26 = por %p24, %p25
    %p27 = scmp.ne.s32.totalorder %s19, %s22
    %p28 = scmp.eq.s32.totalorder %s9, 0
    %p29 = por %p27, %p28
    %p30 = scmp.ne.s32.totalorder %s19, %s22
    %p31 = scmp.eq.s32.totalorder %s14, 1
    %p32 = por %p30, %p31
    %p33 = scmp.ne.s32.totalorder %s22, %s23
    %p34 = scmp.eq.s32.totalorder %s14, 0
    %p35 = por %p33, %p34
    %p36 = scmp.ne.s32.totalorder %s22, %s23
    %p37 = scmp.eq.s32.totalorder %s15, 1
    %p38 = por %p36, %p37
    %p40 = scmp.ne.s32.totalorder %s23, %s39
    %p41 = scmp.eq.s32.totalorder %s15, 0
    %p42 = por %p40, %p41
    %s44 = sadd.s32 %s43, 1
    %p47 = scmp.eq.s32.totalorder %s9, 1
    %p48 = scmp.ne.s32.totalorder %s43, %s45
    %p49 = scmp.eq.s32.totalorder %s9, 0
    %p50 = por %p48, %p49
    %p51 = scmp.ne.s32.totalorder %s43, %s45
    %p52 = scmp.eq.s32.totalorder %s14, 1
    %p53 = por %p51, %p52
    %p54 = scmp.ne.s32.totalorder %s45, %s46
    %p55 = scmp.eq.s32.totalorder %s14, 0
    %p56 = por %p54, %p55
    %p57 = scmp.ne.s32.totalorder %s45, %s46
    %p58 = scmp.eq.s32.totalorder %s15, 1
    %p59 = por %p57, %p58
    %p61 = scmp.ne.s32.totalorder %s46, %s60
    %p62 = scmp.eq.s32.totalorder %s15, 0
    %p63 = por %p61, %p62
    %s65 = sadd.s32 %s64, 1
    %p68 = scmp.eq.s32.totalorder %s9, 1
    %p69 = scmp.ne.s32.totalorder %s64, %s66
    %p70 = scmp.eq.s32.totalorder %s9, 0
    %p71 = por %p69, %p70
    %p72 = scmp.ne.s32.totalorder %s64, %s66
    %p73 = scmp.eq.s32.totalorder %s14, 1
    %p74 = por %p72, %p73
    %p75 = scmp.ne.s32.totalorder %s66, %s67
    %p76 = scmp.eq.s32.totalorder %s14, 0
    %p77 = por %p75, %p76
    %p78 = scmp.ne.s32.totalorder %s66, %s67
    %p79 = scmp.eq.s32.totalorder %s15, 1
    %p80 = por %p78, %p79
    %p82 = scmp.ne.s32.totalorder %s67, %s81
    %p83 = scmp.eq.s32.totalorder %s15, 0
    %p84 = por %p82, %p83
    %s85 = ssub.s32 %s9, %s16
    %p86 = scmp.eq.s32.totalorder %s85, 0
    %s88 = sadd.s32 %s87, 1
    %s89 = scalar_select %p86, %s87, %s88
    %p92 = pneg %p86
    %p93 = scmp.eq.s32.totalorder %s9, 1
    %p94 = por %p92, %p93
    %p95 = scmp.ne.s32.totalorder %s87, %s90
    %p96 = scmp.eq.s32.totalorder %s9, 0
    %p97 = por %p95, %p96
    %p98 = scmp.ne.s32.totalorder %s87, %s90
    %p99 = scmp.eq.s32.totalorder %s14, 1
    %p100 = por %p98, %p99
    %p101 = scmp.ne.s32.totalorder %s90, %s91
    %p102 = scmp.eq.s32.totalorder %s14, 0
    %p103 = por %p101, %p102
    %p104 = scmp.ne.s32.totalorder %s90, %s91
    %p105 = scmp.eq.s32.totalorder %s15, 1
    %p106 = por %p104, %p105
    %p108 = scmp.ne.s32.totalorder %s91, %s107
    %p109 = scmp.eq.s32.totalorder %s15, 0
    %p110 = por %p108, %p109
    %p111 = scmp.le.s32.totalorder 1, %s9
    %p112 = scmp.lt.s32.totalorder %s9, 3
    %p113 = pnand %p111, %p112
    %p114 = pneg %p113
    // Predicated region
    $region9: #{mobilenet_block.7} parent=5 // pred_check
      _
    $region10: #{mobilenet_block.7} parent=5 // pred_check_branch
      %116 = sbr.rel (%p113) target = $region12
    $region11: #{mobilenet_block.7} parent=5 // pred_region
      %s117 = ssub.s32 %s9, 1
      // Predicated region
      $region13: #{mobilenet_block.7} parent=11 // pred_check
        %p118 = pneg %p56
      $region14: #{mobilenet_block.7} parent=11 // pred_check_branch
        %120 = sbr.rel (%p118) target = $region16
      $region15: #{mobilenet_block.7} parent=11 // pred_region
        _
      $region16: #{mobilenet_block.7} parent=11 // pred_fallthru
        _
      // Predicated region
      $region17: #{mobilenet_block.7} parent=11 // pred_check
        %p121 = pneg %p77
      $region18: #{mobilenet_block.7} parent=11 // pred_check_branch
        %123 = sbr.rel (%p121) target = $region20
      $region19: #{mobilenet_block.7} parent=11 // pred_region
        _
      $region20: #{mobilenet_block.7} parent=11 // pred_fallthru
        _
    $region12: #{mobilenet_block.7} parent=5 // pred_fallthru
      _
    %p124 = scmp.lt.s32.totalorder %s9, 2
    // Predicated region
    $region21: #{mobilenet_block.7} parent=5 // pred_check
      %p125 = pneg %p124
    $region22: #{mobilenet_block.7} parent=5 // pred_check_branch
      %127 = sbr.rel (%p125) target = $region24
    $region23: #{mobilenet_block.7} parent=5 // pred_region
      // Predicated region
      $region25: #{mobilenet_block.7} parent=23 // pred_check
        %p128 = pneg %p29
      $region26: #{mobilenet_block.7} parent=23 // pred_check_branch
        %130 = sbr.rel (%p128) target = $region28
      $region27: #{mobilenet_block.7} parent=23 // pred_region
        %s131 = smul.u32 2, %s9
        %p132 = scmp.lt.s32.totalorder %s131, 3
        %s133 = scalar_select %p132, %s131, 3
        %s134 = smul.addr %s133, 8
        %s135 = scalar_lea.vmem %s0, %s134
        %s136 = smul.u32 2, %s9
      $region28: #{mobilenet_block.7} parent=23 // pred_fallthru
        _
    $region24: #{mobilenet_block.7} parent=5 // pred_fallthru
      _
    %p137 = scmp.le.s32.totalorder 1, %s9
    %p138 = scmp.lt.s32.totalorder %s9, 3
    %p139 = pnand %p137, %p138
    %p140 = pneg %p139
    // Predicated region
    $region29: #{mobilenet_block.7} parent=5 // pred_check
      _
    $region30: #{mobilenet_block.7} parent=5 // pred_check_branch
      %142 = sbr.rel (%p139) target = $region32
    $region31: #{mobilenet_block.7} parent=5 // pred_region
      %s143 = ssub.s32 %s9, 1
      %s144 = smul.u32 2, %s14
      %p145 = scmp.lt.s32.totalorder %s144, 3
      %s146 = scalar_select %p145, %s144, 3
      %s147 = smul.addr %s146, 8
      %s148 = scalar_lea.vmem %s0, %s147
      %p149 = pneg %p35
      %p150 = pneg %p32
      %p151 = pneg %p56
      %p152 = pneg %p53
      %p153 = pneg %p77
      %p154 = pneg %p74
      %p155 = pneg %p103
      %p156 = pneg %p100
      %s157 = smul.u32 2, %s14
      %p158 = scmp.lt.s32.totalorder %s157, 3
      %s159 = scalar_select %p158, %s157, 3
      %s160 = smul.addr %s159, 8
      %s161 = scalar_lea.vmem %s3, %s160
      %s162 = smul.u32 2, %s14
      %p163 = scmp.lt.s32.totalorder %s162, 3
      %s164 = scalar_select %p163, %s162, 3
      %s165 = smul.addr %s164, 8
      %s166 = scalar_lea.vmem %s0, %s165
      %s167 = smul.u32 2, %s14
      %s168 = smul.u32 2, %s14
      %p169 = scmp.lt.s32.totalorder %s168, 3
      %s170 = scalar_select %p169, %s168, 3
      %s171 = smul.addr %s170, 8
      %s172 = scalar_lea.vmem %s3, %s171
      %s173 = smul.u32 2, %s14
      %v174 = vld [vmem:[%s166] sm:$0xff]
      %v175 = vld [vmem:[%s166 + $0x8] sm:$0xff]
      %v176 = vld [vmem:[%s1] sm:$0x1]
      %v178 = vlaneseq
      %v179 = vshrl.u32 %v178, 7
      %v180 = vsub.s32 0, %v179
      %v181 = vrot.slane %v176, %v180
      %v183 = vmul.f32 %v174, %v181
      %v184 = vmul.f32 %v175, %v181
      %v185 = vld [vmem:[%s2] sm:$0x1]
      %v187 = vlaneseq
      %v188 = vshrl.u32 %v187, 7
      %v189 = vsub.s32 0, %v188
      %v190 = vrot.slane %v185, %v189
      %v192 = vadd.f32 %v183, %v190
      %v193 = vadd.f32 %v184, %v190
      %194 = vst [vmem:[%s172] sm:$0xff] %v192
      %195 = vst [vmem:[%s172 + $0x8] sm:$0xff] %v193
      %s196 = smul.u32 2, %s14
      %p197 = scmp.lt.s32.totalorder %s196, 3
      %s198 = scalar_select %p197, %s196, 3
      %s199 = smul.addr %s198, 8
      %s200 = scalar_lea.vmem %s3, %s199
      // Predicated region
      $region33: #{mobilenet_block.7} parent=31 // pred_check
        %p201 = pneg %p100
      $region34: #{mobilenet_block.7} parent=31 // pred_check_branch
        %203 = sbr.rel (%p201) target = $region36
      $region35: #{mobilenet_block.7} parent=31 // pred_region
        %s204 = smul.u32 2, %s14
      $region36: #{mobilenet_block.7} parent=31 // pred_fallthru
        _
    $region32: #{mobilenet_block.7} parent=5 // pred_fallthru
      _
    %p205 = scmp.le.s32.totalorder 2, %s9
    // Predicated region
    $region37: #{mobilenet_block.7} parent=5 // pred_check
      %p206 = pneg %p205
    $region38: #{mobilenet_block.7} parent=5 // pred_check_branch
      %208 = sbr.rel (%p206) target = $region40
    $region39: #{mobilenet_block.7} parent=5 // pred_region
      %s209 = ssub.s32 %s9, 2
      // Predicated region
      $region41: #{mobilenet_block.7} parent=39 // pred_check
        %p210 = pneg %p106
      $region42: #{mobilenet_block.7} parent=39 // pred_check_branch
        %212 = sbr.rel (%p210) target = $region44
      $region43: #{mobilenet_block.7} parent=39 // pred_region
        %s213 = smul.u32 2, %s15
        %p214 = scmp.lt.s32.totalorder %s213, 3
        %s215 = scalar_select %p214, %s213, 3
        %s216 = smul.addr %s215, 8
        %s217 = scalar_lea.vmem %s3, %s216
      $region44: #{mobilenet_block.7} parent=39 // pred_fallthru
        _
    $region40: #{mobilenet_block.7} parent=5 // pred_fallthru
      _
  $region6: #{mobilenet_block.7} parent=0 // loop_footer
    %s13 = sadd.s32 1, %s9
  $region7: #{mobilenet_block.7} parent=0 // loop_footer_branch
    %8 = sbr.rel target = $region3
  $region8: #{mobilenet_block.7} parent=0 // loop_exit
    _

</llo_original>
